<compile_context>
chip_gen: v5e
topology: v5e:2x2
jax: 0.10.0
libtpu: 0.0.40
codegen_flags: <defaults>
</compile_context>

<pallas_src>
import functools
import math

import jax
import jax.numpy as jnp
from jax.experimental import pallas as pl
from jax.experimental.pallas import tpu as pltpu


# Weights streamed from HBM in bf16 (matmuls accumulate in f32).  Set to
# jnp.float32 for bit-closer parity with the f32 PyTorch reference.
WEIGHTS_DTYPE = jnp.bfloat16

# Row indices inside the packed per-layer bias / LayerNorm slab (L, 16, BC).
_B_SA_Q, _B_SA_K, _B_SA_V, _B_SA_O = 0, 1, 2, 3
_B_CA_Q, _B_CA_K, _B_CA_V, _B_CA_O = 4, 5, 6, 7
_B_FF1, _B_FF2 = 8, 9
_B_LN1G, _B_LN1B, _B_LN2G, _B_LN2B, _B_LN3G, _B_LN3B = 10, 11, 12, 13, 14, 15
_NUM_BIAS_ROWS = 16

_LN_EPS = 1e-5


# --------------------------------------------------------------------------
# In-kernel helpers
# --------------------------------------------------------------------------
def _layer_norm(x, gamma, beta, eps=_LN_EPS):
    mu = jnp.mean(x, axis=-1, keepdims=True)
    var = jnp.mean(jnp.square(x - mu), axis=-1, keepdims=True)
    return (x - mu) * jax.lax.rsqrt(var + eps) * gamma + beta


# --------------------------------------------------------------------------
# Fused decoder kernel: grid=(batch, layer); activations resident in VMEM
# --------------------------------------------------------------------------
def _decoder_layer_kernel(
    # inputs
    x0_ref, mem_ref, w_ref, b_ref, fcw_ref, fcb_ref,
    # outputs
    out_ref,
    # scratch
    x_scr,
    *, dim_model, ff_hidden, num_heads,
):
    D, F, H = dim_model, ff_hidden, num_heads
    dh = D // H
    T = x_scr.shape[0]
    scale = 1.0 / math.sqrt(dh)

    layer = pl.program_id(1)
    num_layers = pl.num_programs(1)

    # Load the embedded + pos-encoded tokens for this batch element into the
    # resident activation scratch at the first layer step.
    @pl.when(layer == 0)
    def _():
        x_scr[...] = x0_ref[0]

    w_dt = w_ref.dtype

    # ---- packed per-layer parameter views (static slices of the 2 slabs) --
    def wseg(row0, nrows, ncols):
        return w_ref[0, row0:row0 + nrows, 0:ncols]            # bf16 weights

    def brow(r, width=D):
        return b_ref[0, r:r + 1, 0:width]                      # f32 (1, width)

    def split_heads(x2):
        # (R, D) -> (H, R, dh); lane slices + stack (known-good lowering).
        return jnp.stack([x2[:, h * dh:(h + 1) * dh] for h in range(H)],
                         axis=0)

    def attention(q2, k2, v2):
        """q2: (T, D); k2, v2: (S', D).  Heads batched in one einsum each."""
        qh = split_heads(q2)
        kh = split_heads(k2)
        vh = split_heads(v2)
        s = jnp.einsum('htd,hsd->hts', qh, kh,
                       preferred_element_type=jnp.float32) * scale
        s = s - jnp.max(s, axis=-1, keepdims=True)
        p = jnp.exp(s)
        p = p * pl.reciprocal(jnp.sum(p, axis=-1, keepdims=True), approx=True)
        ctx = jnp.einsum('hts,hsd->htd', p, vh,
                         preferred_element_type=jnp.float32)   # (H, T, dh)
        return jnp.concatenate([ctx[h] for h in range(H)], axis=-1)  # (T, D)

    x = x_scr[...]                                             # (T, D) f32

    # ---- self attention (fused QKV matmul) + residual + LayerNorm ---------
    qkv = jnp.dot(x.astype(w_dt), wseg(0, D, 3 * D),
                  preferred_element_type=jnp.float32)          # (T, 3D)
    q = qkv[:, 0 * D:1 * D] + brow(_B_SA_Q)
    k = qkv[:, 1 * D:2 * D] + brow(_B_SA_K)
    v = qkv[:, 2 * D:3 * D] + brow(_B_SA_V)
    sa_ctx = attention(q, k, v)
    sa_out = jnp.dot(sa_ctx.astype(w_dt), wseg(D, D, D),
                     preferred_element_type=jnp.float32) + brow(_B_SA_O)
    h1 = _layer_norm(x + sa_out, brow(_B_LN1G), brow(_B_LN1B))

    # ---- cross attention (fused KV matmul on memory) + residual + LN ------
    mem = mem_ref[0]                                           # (S, D) f32
    qc = jnp.dot(h1.astype(w_dt), wseg(2 * D, D, D),
                 preferred_element_type=jnp.float32) + brow(_B_CA_Q)
    kv = jnp.dot(mem.astype(w_dt), wseg(3 * D, D, 2 * D),
                 preferred_element_type=jnp.float32)           # (S, 2D)
    kc = kv[:, 0:D] + brow(_B_CA_K)
    vc = kv[:, D:2 * D] + brow(_B_CA_V)
    ca_ctx = attention(qc, kc, vc)
    ca_out = jnp.dot(ca_ctx.astype(w_dt), wseg(4 * D, D, D),
                     preferred_element_type=jnp.float32) + brow(_B_CA_O)
    h2 = _layer_norm(h1 + ca_out, brow(_B_LN2G), brow(_B_LN2B))

    # ---- feed forward (ReLU) + residual + LayerNorm ------------------------
    f = jnp.dot(h2.astype(w_dt), wseg(5 * D, D, F),
                preferred_element_type=jnp.float32) + brow(_B_FF1, F)
    f = jnp.maximum(f, 0.0)
    f = jnp.dot(f.astype(w_dt), wseg(6 * D, F, D),
                preferred_element_type=jnp.float32) + brow(_B_FF2)
    h3 = _layer_norm(h2 + f, brow(_B_LN3G), brow(_B_LN3B))

    x_scr[...] = h3

    # ---- final Linear fused into the last layer step (lane-dense Vp) ------
    @pl.when(layer == num_layers - 1)
    def _():
        out_ref[0] = (jnp.dot(h3.astype(fcw_ref.dtype), fcw_ref[...],
                              preferred_element_type=jnp.float32)
                      + fcb_ref[...])


# --------------------------------------------------------------------------
# pallas_call wrapper
# --------------------------------------------------------------------------
def _block_vmem_bytes(block_shape, dtype):
    itemsize = jnp.dtype(dtype).itemsize
    shape = tuple(int(s) for s in block_shape)
    if len(shape) == 1:
        shape = (1,) + shape
    *lead, r, c = shape
    sub = max(8, 32 // itemsize)               # sublane packing per dtype
    rp = ((r + sub - 1) // sub) * sub
    cp = ((c + 127) // 128) * 128
    n = 1
    for s in lead:
        n *= s
    return n * rp * cp * itemsize


def fused_decoder_pallas(x_btd, mem_bsd, w_slab, b_slab, fc_w, fc_b,
                         *, num_heads, ff_hidden):
    B, T, D = x_btd.shape
    _, S, _ = mem_bsd.shape
    L, RT, WC = w_slab.shape
    BC = b_slab.shape[2]
    Vp = fc_w.shape[1]
    assert D % num_heads == 0

    kernel = functools.partial(_decoder_layer_kernel,
                               dim_model=D, ff_hidden=ff_hidden,
                               num_heads=num_heads)

    # VMEM residency estimate: double-buffered pipeline blocks + scratch.
    blocks = [((1, T, D), x_btd.dtype), ((1, S, D), mem_bsd.dtype),
              ((1, RT, WC), w_slab.dtype),
              ((1, _NUM_BIAS_ROWS, BC), b_slab.dtype),
              ((D, Vp), fc_w.dtype), ((1, Vp), fc_b.dtype),
              ((1, T, Vp), jnp.float32)]
    est = 2 * sum(_block_vmem_bytes(s, d) for s, d in blocks)
    est += _block_vmem_bytes((T, D), jnp.float32)
    vmem_limit = int(min(96 << 20, max(32 << 20, 2 * est + (4 << 20))))

    return pl.pallas_call(
        kernel,
        out_shape=jax.ShapeDtypeStruct((B, T, Vp), jnp.float32),
        grid=(B, L),
        in_specs=[
            pl.BlockSpec((1, T, D), lambda b, l: (b, 0, 0)),          # x0
            pl.BlockSpec((1, S, D), lambda b, l: (b, 0, 0)),          # memory
            pl.BlockSpec((1, RT, WC), lambda b, l: (l, 0, 0)),        # weights
            pl.BlockSpec((1, _NUM_BIAS_ROWS, BC), lambda b, l: (l, 0, 0)),
            pl.BlockSpec((D, Vp), lambda b, l: (0, 0)),               # fc_w
            pl.BlockSpec((1, Vp), lambda b, l: (0, 0)),               # fc_b
        ],
        out_specs=pl.BlockSpec((1, T, Vp), lambda b, l: (b, 0, 0)),
        scratch_shapes=[pltpu.VMEM((T, D), jnp.float32)],
        compiler_params=pltpu.CompilerParams(
            dimension_semantics=("parallel", "arbitrary"),
            vmem_limit_bytes=vmem_limit),
    )(x_btd, mem_bsd, w_slab, b_slab, fc_w, fc_b)


# --------------------------------------------------------------------------
# Parameter construction (deterministic, synthetic) + packing for the kernel
# --------------------------------------------------------------------------
def make_positional_encoding(dim_model, max_len):
    n = max_len + 2
    pos = jnp.arange(n, dtype=jnp.float32)[:, None]
    div = jnp.exp(
        jnp.arange(0, dim_model, 2, dtype=jnp.float32)
        * (-jnp.log(10000.0) / dim_model))
    pe = jnp.zeros((n, dim_model), dtype=jnp.float32)
    pe = pe.at[:, 0::2].set(jnp.sin(pos * div))
    pe = pe.at[:, 1::2].set(jnp.cos(pos * div))
    return pe


def init_params(key, output_dim, max_len, dim_model, num_layers, ff_hidden):
    def nrm(k, shape, scale=0.05):
        return scale * jax.random.normal(k, shape, dtype=jnp.float32)

    keys = iter(jax.random.split(key, 8 + num_layers * 32))
    params = {
        "emb": nrm(next(keys), (output_dim, dim_model), 0.5),
        "pe": make_positional_encoding(dim_model, max_len),
        "fc_w": nrm(next(keys), (dim_model, output_dim)),
        "fc_b": nrm(next(keys), (output_dim,)),
        "layers": [],
    }
    for _ in range(num_layers):
        lp = {}
        for pref in ("sa", "ca"):
            for name in ("wq", "wk", "wv", "wo"):
                lp[f"{pref}_{name}"] = nrm(next(keys), (dim_model, dim_model))
            for name in ("bq", "bk", "bv", "bo"):
                lp[f"{pref}_{name}"] = nrm(next(keys), (dim_model,))
        lp["ff_w1"] = nrm(next(keys), (dim_model, ff_hidden))
        lp["ff_b1"] = nrm(next(keys), (ff_hidden,))
        lp["ff_w2"] = nrm(next(keys), (ff_hidden, dim_model))
        lp["ff_b2"] = nrm(next(keys), (dim_model,))
        for i in (1, 2, 3):
            lp[f"ln{i}_g"] = jnp.ones((dim_model,), jnp.float32)
            lp[f"ln{i}_b"] = jnp.zeros((dim_model,), jnp.float32)
        params["layers"].append(lp)
    return params


def pack_params(params, weights_dtype=WEIGHTS_DTYPE, lane=128):
    """Pack per-layer params into 2 slabs/layer (row-packed bf16 weights +
    f32 bias/LN rows); lane-pad fc_out to a multiple of 128 columns."""
    layers = params["layers"]
    D = params["emb"].shape[1]
    F = layers[0]["ff_w1"].shape[1]
    WC = max(3 * D, F)          # weight-slab column width
    BC = max(D, F)              # bias-slab column width

    def pad_cols(a, width):
        return jnp.pad(a, ((0, 0), (0, width - a.shape[1])))

    def one_layer_w(lp):
        segs = [
            jnp.concatenate([lp["sa_wq"], lp["sa_wk"], lp["sa_wv"]], axis=1),
            lp["sa_wo"],
            lp["ca_wq"],
            jnp.concatenate([lp["ca_wk"], lp["ca_wv"]], axis=1),
            lp["ca_wo"],
            lp["ff_w1"],
            lp["ff_w2"],
        ]
        return jnp.concatenate([pad_cols(s, WC) for s in segs], axis=0)

    def one_layer_b(lp):
        rows = [lp["sa_bq"], lp["sa_bk"], lp["sa_bv"], lp["sa_bo"],
                lp["ca_bq"], lp["ca_bk"], lp["ca_bv"], lp["ca_bo"],
                lp["ff_b1"], lp["ff_b2"],
                lp["ln1_g"], lp["ln1_b"], lp["ln2_g"], lp["ln2_b"],
                lp["ln3_g"], lp["ln3_b"]]
        return jnp.stack([jnp.pad(r, (0, BC - r.shape[0])) for r in rows],
                         axis=0)

    w_slab = jnp.stack([one_layer_w(lp) for lp in layers],
                       axis=0).astype(weights_dtype)       # (L, 6D+F, WC)
    b_slab = jnp.stack([one_layer_b(lp) for lp in layers],
                       axis=0).astype(jnp.float32)         # (L, 16, BC)

    V = params["fc_w"].shape[1]
    Vp = ((V + lane - 1) // lane) * lane
    fc_w = jnp.zeros((D, Vp), weights_dtype).at[:, :V].set(
        params["fc_w"].astype(weights_dtype))
    fc_b = jnp.zeros((1, Vp), jnp.float32).at[:, :V].set(
        params["fc_b"][None, :])
    return w_slab, b_slab, fc_w, fc_b, V


# --------------------------------------------------------------------------
# Full forward pass (matches Decoder.forward with all masks = None, eval mode)
# --------------------------------------------------------------------------
@functools.partial(jax.jit, static_argnames=("num_heads",))
def decoder_forward(params, decoder_input, memory_sbd, *, num_heads):
    B, T = decoder_input.shape
    F = params["layers"][0]["ff_w1"].shape[1]

    # embedding lookup (gather) + positional encoding — plain-JAX glue
    emb = jnp.take(params["emb"], decoder_input, axis=0)       # (B, T, D)
    x = emb + params["pe"][:T][None, :, :]                     # (B, T, D)

    # memory arrives as (S, B, D) (batch_first=False); tiny transpose in XLA
    mem_bsd = jnp.transpose(memory_sbd, (1, 0, 2))             # (B, S, D)

    w_slab, b_slab, fc_w, fc_b, V = pack_params(params)

    logits_pad = fused_decoder_pallas(
        x, mem_bsd, w_slab, b_slab, fc_w, fc_b,
        num_heads=num_heads, ff_hidden=F)                      # (B, T, Vp)

    return logits_pad[:, :, :V]                                # (B, T, V)


# --------------------------------------------------------------------------
if __name__ == "__main__":
    # small shapes consistent with the module
    output_dim = 50     # vocab
    max_len = 16
    dim_model = 32
    num_heads = 4
    num_layers = 2
    ff_hidden = 64
    B, T, S = 2, 8, 10

    key = jax.random.PRNGKey(0)
    k_params, k_tok, k_mem = jax.random.split(key, 3)

    params = init_params(k_params, output_dim, max_len, dim_model,
                         num_layers, ff_hidden)

    decoder_input = jax.random.randint(k_tok, (B, T), 0, output_dim,
                                       dtype=jnp.int32)
    memory = jax.random.normal(k_mem, (S, B, dim_model), dtype=jnp.float32)

    logits = decoder_forward(params, decoder_input, memory,
                             num_heads=num_heads)
    jax.block_until_ready(logits)

    assert logits.shape == (B, T, output_dim)
    assert bool(jnp.all(jnp.isfinite(logits)))
    print("KERNEL_OK")
</pallas_src>

<mosaic_0001>
module attributes {stable_mosaic.version = 11 : i64} {
  func.func @_decoder_layer_kernel(%arg0: i32, %arg1: i32, %arg2: memref<1x8x32xf32, #tpu.memory_space<vmem>>, %arg3: memref<1x10x32xf32, #tpu.memory_space<vmem>>, %arg4: memref<1x256x96xbf16, #tpu.memory_space<vmem>>, %arg5: memref<1x16x64xf32, #tpu.memory_space<vmem>>, %arg6: memref<32x128xbf16, #tpu.memory_space<vmem>>, %arg7: memref<1x128xf32, #tpu.memory_space<vmem>>, %arg8: memref<1x8x128xf32, #tpu.memory_space<vmem>>, %arg9: memref<8x32xf32, #tpu.memory_space<vmem>>) attributes {dimension_semantics = [#tpu.dimension_semantics<parallel>, #tpu.dimension_semantics<arbitrary>], iteration_bounds = array<i64: 2, 2>, scalar_prefetch = 0 : i64, scratch_operands = 1 : i64, tpu.core_type = #tpu.core_type<tc>, window_params = [{transform_indices = @transform_0, window_bounds = array<i64: 1, 8, 32>}, {transform_indices = @transform_1, window_bounds = array<i64: 1, 10, 32>}, {transform_indices = @transform_2, window_bounds = array<i64: 1, 256, 96>}, {transform_indices = @transform_3, window_bounds = array<i64: 1, 16, 64>}, {pipeline_mode = #tpu.pipeline_mode<synchronous>, transform_indices = @transform_4, window_bounds = array<i64: 32, 128>}, {pipeline_mode = #tpu.pipeline_mode<synchronous>, transform_indices = @transform_5, window_bounds = array<i64: 1, 128>}, {transform_indices = @transform_6, window_bounds = array<i64: 1, 8, 128>}]} {
    %c0_i32 = arith.constant 0 : i32
    %0 = arith.cmpi eq, %arg1, %c0_i32 : i32
    %1 = arith.extui %0 : i1 to i32
    %c0_i32_0 = arith.constant 0 : i32
    %2 = arith.cmpi ne, %1, %c0_i32_0 : i32
    scf.if %2 {
      %c0_88 = arith.constant 0 : index
      %c0_89 = arith.constant 0 : index
      %c0_90 = arith.constant 0 : index
      %266 = vector.load %arg2[%c0_88, %c0_89, %c0_90] : memref<1x8x32xf32, #tpu.memory_space<vmem>>, vector<1x8x32xf32>
      %267 = vector.shape_cast %266 : vector<1x8x32xf32> to vector<8x32xf32>
      %c0_91 = arith.constant 0 : index
      %c0_92 = arith.constant 0 : index
      %268 = vector.load %arg9[%c0_91, %c0_92] : memref<8x32xf32, #tpu.memory_space<vmem>>, vector<8x32xf32>
      tpu.vector_store %arg9[%c0_91, %c0_92], %267 {strides = array<i32>} : memref<8x32xf32, #tpu.memory_space<vmem>>, vector<8x32xf32>,
    } else {
    }
    %c0 = arith.constant 0 : index
    %c0_1 = arith.constant 0 : index
    %3 = vector.load %arg9[%c0, %c0_1] : memref<8x32xf32, #tpu.memory_space<vmem>>, vector<8x32xf32>
    %4 = arith.truncf %3 : vector<8x32xf32> to vector<8x32xbf16>
    %c0_2 = arith.constant 0 : index
    %c0_3 = arith.constant 0 : index
    %c0_4 = arith.constant 0 : index
    %5 = vector.load %arg4[%c0_2, %c0_3, %c0_4] : memref<1x256x96xbf16, #tpu.memory_space<vmem>>, vector<1x32x96xbf16>
    %6 = vector.shape_cast %5 : vector<1x32x96xbf16> to vector<32x96xbf16>
    %cst = arith.constant dense<0.000000e+00> : vector<8x96xf32>
    %7 = tpu.matmul %4, %6, %cst {dimension_numbers = #tpu.dot_dimension_numbers<[1], [0], [0], [1], [0, 0, 1, 1], [], []>} : vector<8x32xbf16>, vector<32x96xbf16>, vector<8x96xf32> -> vector<8x96xf32>
    %8 = vector.extract_strided_slice %7 {offsets = [0, 0], sizes = [8, 32], strides = [1, 1]} : vector<8x96xf32> to vector<8x32xf32>
    %c0_5 = arith.constant 0 : index
    %c0_6 = arith.constant 0 : index
    %c0_7 = arith.constant 0 : index
    %9 = vector.load %arg5[%c0_5, %c0_6, %c0_7] : memref<1x16x64xf32, #tpu.memory_space<vmem>>, vector<1x1x32xf32>
    %10 = vector.shape_cast %9 : vector<1x1x32xf32> to vector<1x32xf32>
    %11 = vector.broadcast %10 : vector<1x32xf32> to vector<8x32xf32>
    %12 = arith.addf %8, %11 : vector<8x32xf32>
    %13 = vector.extract_strided_slice %7 {offsets = [0, 32], sizes = [8, 32], strides = [1, 1]} : vector<8x96xf32> to vector<8x32xf32>
    %c0_8 = arith.constant 0 : index
    %c1 = arith.constant 1 : index
    %c0_9 = arith.constant 0 : index
    %14 = vector.load %arg5[%c0_8, %c1, %c0_9] : memref<1x16x64xf32, #tpu.memory_space<vmem>>, vector<1x1x32xf32>
    %15 = vector.shape_cast %14 : vector<1x1x32xf32> to vector<1x32xf32>
    %16 = vector.broadcast %15 : vector<1x32xf32> to vector<8x32xf32>
    %17 = arith.addf %13, %16 : vector<8x32xf32>
    %18 = vector.extract_strided_slice %7 {offsets = [0, 64], sizes = [8, 32], strides = [1, 1]} : vector<8x96xf32> to vector<8x32xf32>
    %c0_10 = arith.constant 0 : index
    %c2 = arith.constant 2 : index
    %c0_11 = arith.constant 0 : index
    %19 = vector.load %arg5[%c0_10, %c2, %c0_11] : memref<1x16x64xf32, #tpu.memory_space<vmem>>, vector<1x1x32xf32>
    %20 = vector.shape_cast %19 : vector<1x1x32xf32> to vector<1x32xf32>
    %21 = vector.broadcast %20 : vector<1x32xf32> to vector<8x32xf32>
    %22 = arith.addf %18, %21 : vector<8x32xf32>
    %23 = vector.extract_strided_slice %12 {offsets = [0, 0], sizes = [8, 8], strides = [1, 1]} : vector<8x32xf32> to vector<8x8xf32>
    %24 = vector.extract_strided_slice %12 {offsets = [0, 8], sizes = [8, 8], strides = [1, 1]} : vector<8x32xf32> to vector<8x8xf32>
    %25 = vector.extract_strided_slice %12 {offsets = [0, 16], sizes = [8, 8], strides = [1, 1]} : vector<8x32xf32> to vector<8x8xf32>
    %26 = vector.extract_strided_slice %12 {offsets = [0, 24], sizes = [8, 8], strides = [1, 1]} : vector<8x32xf32> to vector<8x8xf32>
    %27 = vector.shape_cast %23 : vector<8x8xf32> to vector<1x8x8xf32>
    %28 = vector.shape_cast %24 : vector<8x8xf32> to vector<1x8x8xf32>
    %29 = vector.shape_cast %25 : vector<8x8xf32> to vector<1x8x8xf32>
    %30 = vector.shape_cast %26 : vector<8x8xf32> to vector<1x8x8xf32>
    %31 = tpu.concatenate %27, %28, %29, %30 in 0 : vector<1x8x8xf32>, vector<1x8x8xf32>, vector<1x8x8xf32>, vector<1x8x8xf32> -> vector<4x8x8xf32>
    %32 = vector.extract_strided_slice %17 {offsets = [0, 0], sizes = [8, 8], strides = [1, 1]} : vector<8x32xf32> to vector<8x8xf32>
    %33 = vector.extract_strided_slice %17 {offsets = [0, 8], sizes = [8, 8], strides = [1, 1]} : vector<8x32xf32> to vector<8x8xf32>
    %34 = vector.extract_strided_slice %17 {offsets = [0, 16], sizes = [8, 8], strides = [1, 1]} : vector<8x32xf32> to vector<8x8xf32>
    %35 = vector.extract_strided_slice %17 {offsets = [0, 24], sizes = [8, 8], strides = [1, 1]} : vector<8x32xf32> to vector<8x8xf32>
    %36 = vector.shape_cast %32 : vector<8x8xf32> to vector<1x8x8xf32>
    %37 = vector.shape_cast %33 : vector<8x8xf32> to vector<1x8x8xf32>
    %38 = vector.shape_cast %34 : vector<8x8xf32> to vector<1x8x8xf32>
    %39 = vector.shape_cast %35 : vector<8x8xf32> to vector<1x8x8xf32>
    %40 = tpu.concatenate %36, %37, %38, %39 in 0 : vector<1x8x8xf32>, vector<1x8x8xf32>, vector<1x8x8xf32>, vector<1x8x8xf32> -> vector<4x8x8xf32>
    %41 = vector.extract_strided_slice %22 {offsets = [0, 0], sizes = [8, 8], strides = [1, 1]} : vector<8x32xf32> to vector<8x8xf32>
    %42 = vector.extract_strided_slice %22 {offsets = [0, 8], sizes = [8, 8], strides = [1, 1]} : vector<8x32xf32> to vector<8x8xf32>
    %43 = vector.extract_strided_slice %22 {offsets = [0, 16], sizes = [8, 8], strides = [1, 1]} : vector<8x32xf32> to vector<8x8xf32>
    %44 = vector.extract_strided_slice %22 {offsets = [0, 24], sizes = [8, 8], strides = [1, 1]} : vector<8x32xf32> to vector<8x8xf32>
    %45 = vector.shape_cast %41 : vector<8x8xf32> to vector<1x8x8xf32>
    %46 = vector.shape_cast %42 : vector<8x8xf32> to vector<1x8x8xf32>
    %47 = vector.shape_cast %43 : vector<8x8xf32> to vector<1x8x8xf32>
    %48 = vector.shape_cast %44 : vector<8x8xf32> to vector<1x8x8xf32>
    %49 = tpu.concatenate %45, %46, %47, %48 in 0 : vector<1x8x8xf32>, vector<1x8x8xf32>, vector<1x8x8xf32>, vector<1x8x8xf32> -> vector<4x8x8xf32>
    "tpu.trace_start"() <{level = 10 : i32, message = "htd,hsd->hts"}> : () -> ()
    %cst_12 = arith.constant dense<0.000000e+00> : vector<4x8x8xf32>
    %50 = tpu.matmul %31, %40, %cst_12 {dimension_numbers = #tpu.dot_dimension_numbers<[2], [2], [1], [1], [0, 0, 0, 1, 1, 1], [0], [0]>} : vector<4x8x8xf32>, vector<4x8x8xf32>, vector<4x8x8xf32> -> vector<4x8x8xf32>
    "tpu.trace_stop"() : () -> ()
    %cst_13 = arith.constant 0.353553385 : f32
    %51 = vector.broadcast %cst_13 : f32 to vector<4x8x8xf32>
    %52 = arith.mulf %50, %51 : vector<4x8x8xf32>
    %cst_14 = arith.constant dense<0xFF800000> : vector<4x8xf32>
    %53 = vector.multi_reduction <maximumf>, %52, %cst_14 [2] : vector<4x8x8xf32> to vector<4x8xf32>
    %54 = vector.shape_cast %53 : vector<4x8xf32> to vector<4x8x1xf32>
    %55 = vector.broadcast %54 : vector<4x8x1xf32> to vector<4x8x8xf32>
    %56 = arith.subf %52, %55 : vector<4x8x8xf32>
    %57 = math.exp %56 : vector<4x8x8xf32>
    %cst_15 = arith.constant dense<0.000000e+00> : vector<4x8xf32>
    %58 = vector.multi_reduction <add>, %57, %cst_15 [2] : vector<4x8x8xf32> to vector<4x8xf32>
    %59 = vector.shape_cast %58 : vector<4x8xf32> to vector<4x8x1xf32>
    %60 = tpu.reciprocal %59 {approx = true} : vector<4x8x1xf32> -> vector<4x8x1xf32>
    %61 = vector.broadcast %60 : vector<4x8x1xf32> to vector<4x8x8xf32>
    %62 = arith.mulf %57, %61 : vector<4x8x8xf32>
    "tpu.trace_start"() <{level = 10 : i32, message = "hts,hsd->htd"}> : () -> ()
    %cst_16 = arith.constant dense<0.000000e+00> : vector<4x8x8xf32>
    %63 = tpu.matmul %62, %49, %cst_16 {dimension_numbers = #tpu.dot_dimension_numbers<[2], [1], [1], [2], [0, 0, 0, 1, 1, 2], [0], [0]>} : vector<4x8x8xf32>, vector<4x8x8xf32>, vector<4x8x8xf32> -> vector<4x8x8xf32>
    "tpu.trace_stop"() : () -> ()
    %64 = vector.extract_strided_slice %63 {offsets = [0, 0, 0], sizes = [1, 8, 8], strides = [1, 1, 1]} : vector<4x8x8xf32> to vector<1x8x8xf32>
    %65 = vector.shape_cast %64 : vector<1x8x8xf32> to vector<8x8xf32>
    %66 = vector.extract_strided_slice %63 {offsets = [1, 0, 0], sizes = [1, 8, 8], strides = [1, 1, 1]} : vector<4x8x8xf32> to vector<1x8x8xf32>
    %67 = vector.shape_cast %66 : vector<1x8x8xf32> to vector<8x8xf32>
    %68 = vector.extract_strided_slice %63 {offsets = [2, 0, 0], sizes = [1, 8, 8], strides = [1, 1, 1]} : vector<4x8x8xf32> to vector<1x8x8xf32>
    %69 = vector.shape_cast %68 : vector<1x8x8xf32> to vector<8x8xf32>
    %70 = vector.extract_strided_slice %63 {offsets = [3, 0, 0], sizes = [1, 8, 8], strides = [1, 1, 1]} : vector<4x8x8xf32> to vector<1x8x8xf32>
    %71 = vector.shape_cast %70 : vector<1x8x8xf32> to vector<8x8xf32>
    %72 = tpu.concatenate %65, %67, %69, %71 in 1 : vector<8x8xf32>, vector<8x8xf32>, vector<8x8xf32>, vector<8x8xf32> -> vector<8x32xf32>
    %73 = arith.truncf %72 : vector<8x32xf32> to vector<8x32xbf16>
    %c0_17 = arith.constant 0 : index
    %c32 = arith.constant 32 : index
    %c0_18 = arith.constant 0 : index
    %74 = vector.load %arg4[%c0_17, %c32, %c0_18] : memref<1x256x96xbf16, #tpu.memory_space<vmem>>, vector<1x32x32xbf16>
    %75 = vector.shape_cast %74 : vector<1x32x32xbf16> to vector<32x32xbf16>
    %cst_19 = arith.constant dense<0.000000e+00> : vector<8x32xf32>
    %76 = tpu.matmul %73, %75, %cst_19 {dimension_numbers = #tpu.dot_dimension_numbers<[1], [0], [0], [1], [0, 0, 1, 1], [], []>} : vector<8x32xbf16>, vector<32x32xbf16>, vector<8x32xf32> -> vector<8x32xf32>
    %c0_20 = arith.constant 0 : index
    %c3 = arith.constant 3 : index
    %c0_21 = arith.constant 0 : index
    %77 = vector.load %arg5[%c0_20, %c3, %c0_21] : memref<1x16x64xf32, #tpu.memory_space<vmem>>, vector<1x1x32xf32>
    %78 = vector.shape_cast %77 : vector<1x1x32xf32> to vector<1x32xf32>
    %79 = vector.broadcast %78 : vector<1x32xf32> to vector<8x32xf32>
    %80 = arith.addf %76, %79 : vector<8x32xf32>
    %81 = arith.addf %3, %80 : vector<8x32xf32>
    %c0_22 = arith.constant 0 : index
    %c10 = arith.constant 10 : index
    %c0_23 = arith.constant 0 : index
    %82 = vector.load %arg5[%c0_22, %c10, %c0_23] : memref<1x16x64xf32, #tpu.memory_space<vmem>>, vector<1x1x32xf32>
    %83 = vector.shape_cast %82 : vector<1x1x32xf32> to vector<1x32xf32>
    %c0_24 = arith.constant 0 : index
    %c11 = arith.constant 11 : index
    %c0_25 = arith.constant 0 : index
    %84 = vector.load %arg5[%c0_24, %c11, %c0_25] : memref<1x16x64xf32, #tpu.memory_space<vmem>>, vector<1x1x32xf32>
    %85 = vector.shape_cast %84 : vector<1x1x32xf32> to vector<1x32xf32>
    %cst_26 = arith.constant dense<0.000000e+00> : vector<8xf32>
    %86 = vector.multi_reduction <add>, %81, %cst_26 [1] : vector<8x32xf32> to vector<8xf32>
    %87 = vector.shape_cast %86 : vector<8xf32> to vector<8x1xf32>
    %cst_27 = arith.constant 3.200000e+01 : f32
    %88 = vector.broadcast %cst_27 : f32 to vector<8x1xf32>
    %89 = arith.divf %87, %88 : vector<8x1xf32>
    %90 = vector.broadcast %89 : vector<8x1xf32> to vector<8x32xf32>
    %91 = arith.subf %81, %90 : vector<8x32xf32>
    %92 = arith.mulf %91, %91 : vector<8x32xf32>
    %cst_28 = arith.constant dense<0.000000e+00> : vector<8xf32>
    %93 = vector.multi_reduction <add>, %92, %cst_28 [1] : vector<8x32xf32> to vector<8xf32>
    %94 = vector.shape_cast %93 : vector<8xf32> to vector<8x1xf32>
    %cst_29 = arith.constant 3.200000e+01 : f32
    %95 = vector.broadcast %cst_29 : f32 to vector<8x1xf32>
    %96 = arith.divf %94, %95 : vector<8x1xf32>
    %97 = vector.broadcast %89 : vector<8x1xf32> to vector<8x32xf32>
    %98 = arith.subf %81, %97 : vector<8x32xf32>
    %cst_30 = arith.constant 9.99999974E-6 : f32
    %99 = vector.broadcast %cst_30 : f32 to vector<8x1xf32>
    %100 = arith.addf %96, %99 : vector<8x1xf32>
    %101 = math.rsqrt %100 : vector<8x1xf32>
    %102 = vector.broadcast %101 : vector<8x1xf32> to vector<8x32xf32>
    %103 = arith.mulf %98, %102 : vector<8x32xf32>
    %104 = vector.broadcast %83 : vector<1x32xf32> to vector<8x32xf32>
    %105 = arith.mulf %103, %104 : vector<8x32xf32>
    %106 = vector.broadcast %85 : vector<1x32xf32> to vector<8x32xf32>
    %107 = arith.addf %105, %106 : vector<8x32xf32>
    %c0_31 = arith.constant 0 : index
    %c0_32 = arith.constant 0 : index
    %c0_33 = arith.constant 0 : index
    %108 = vector.load %arg3[%c0_31, %c0_32, %c0_33] : memref<1x10x32xf32, #tpu.memory_space<vmem>>, vector<1x10x32xf32>
    %109 = vector.shape_cast %108 : vector<1x10x32xf32> to vector<10x32xf32>
    %110 = arith.truncf %107 : vector<8x32xf32> to vector<8x32xbf16>
    %c0_34 = arith.constant 0 : index
    %c64 = arith.constant 64 : index
    %c0_35 = arith.constant 0 : index
    %111 = vector.load %arg4[%c0_34, %c64, %c0_35] : memref<1x256x96xbf16, #tpu.memory_space<vmem>>, vector<1x32x32xbf16>
    %112 = vector.shape_cast %111 : vector<1x32x32xbf16> to vector<32x32xbf16>
    %cst_36 = arith.constant dense<0.000000e+00> : vector<8x32xf32>
    %113 = tpu.matmul %110, %112, %cst_36 {dimension_numbers = #tpu.dot_dimension_numbers<[1], [0], [0], [1], [0, 0, 1, 1], [], []>} : vector<8x32xbf16>, vector<32x32xbf16>, vector<8x32xf32> -> vector<8x32xf32>
    %c0_37 = arith.constant 0 : index
    %c4 = arith.constant 4 : index
    %c0_38 = arith.constant 0 : index
    %114 = vector.load %arg5[%c0_37, %c4, %c0_38] : memref<1x16x64xf32, #tpu.memory_space<vmem>>, vector<1x1x32xf32>
    %115 = vector.shape_cast %114 : vector<1x1x32xf32> to vector<1x32xf32>
    %116 = vector.broadcast %115 : vector<1x32xf32> to vector<8x32xf32>
    %117 = arith.addf %113, %116 : vector<8x32xf32>
    %118 = arith.truncf %109 : vector<10x32xf32> to vector<10x32xbf16>
    %c0_39 = arith.constant 0 : index
    %c96 = arith.constant 96 : index
    %c0_40 = arith.constant 0 : index
    %119 = vector.load %arg4[%c0_39, %c96, %c0_40] : memref<1x256x96xbf16, #tpu.memory_space<vmem>>, vector<1x32x64xbf16>
    %120 = vector.shape_cast %119 : vector<1x32x64xbf16> to vector<32x64xbf16>
    %cst_41 = arith.constant dense<0.000000e+00> : vector<10x64xf32>
    %121 = tpu.matmul %118, %120, %cst_41 {dimension_numbers = #tpu.dot_dimension_numbers<[1], [0], [0], [1], [0, 0, 1, 1], [], []>} : vector<10x32xbf16>, vector<32x64xbf16>, vector<10x64xf32> -> vector<10x64xf32>
    %122 = vector.extract_strided_slice %121 {offsets = [0, 0], sizes = [10, 32], strides = [1, 1]} : vector<10x64xf32> to vector<10x32xf32>
    %c0_42 = arith.constant 0 : index
    %c5 = arith.constant 5 : index
    %c0_43 = arith.constant 0 : index
    %123 = vector.load %arg5[%c0_42, %c5, %c0_43] : memref<1x16x64xf32, #tpu.memory_space<vmem>>, vector<1x1x32xf32>
    %124 = vector.shape_cast %123 : vector<1x1x32xf32> to vector<1x32xf32>
    %125 = vector.broadcast %124 : vector<1x32xf32> to vector<10x32xf32>
    %126 = arith.addf %122, %125 : vector<10x32xf32>
    %127 = vector.extract_strided_slice %121 {offsets = [0, 32], sizes = [10, 32], strides = [1, 1]} : vector<10x64xf32> to vector<10x32xf32>
    %c0_44 = arith.constant 0 : index
    %c6 = arith.constant 6 : index
    %c0_45 = arith.constant 0 : index
    %128 = vector.load %arg5[%c0_44, %c6, %c0_45] : memref<1x16x64xf32, #tpu.memory_space<vmem>>, vector<1x1x32xf32>
    %129 = vector.shape_cast %128 : vector<1x1x32xf32> to vector<1x32xf32>
    %130 = vector.broadcast %129 : vector<1x32xf32> to vector<10x32xf32>
    %131 = arith.addf %127, %130 : vector<10x32xf32>
    %132 = vector.extract_strided_slice %117 {offsets = [0, 0], sizes = [8, 8], strides = [1, 1]} : vector<8x32xf32> to vector<8x8xf32>
    %133 = vector.extract_strided_slice %117 {offsets = [0, 8], sizes = [8, 8], strides = [1, 1]} : vector<8x32xf32> to vector<8x8xf32>
    %134 = vector.extract_strided_slice %117 {offsets = [0, 16], sizes = [8, 8], strides = [1, 1]} : vector<8x32xf32> to vector<8x8xf32>
    %135 = vector.extract_strided_slice %117 {offsets = [0, 24], sizes = [8, 8], strides = [1, 1]} : vector<8x32xf32> to vector<8x8xf32>
    %136 = vector.shape_cast %132 : vector<8x8xf32> to vector<1x8x8xf32>
    %137 = vector.shape_cast %133 : vector<8x8xf32> to vector<1x8x8xf32>
    %138 = vector.shape_cast %134 : vector<8x8xf32> to vector<1x8x8xf32>
    %139 = vector.shape_cast %135 : vector<8x8xf32> to vector<1x8x8xf32>
    %140 = tpu.concatenate %136, %137, %138, %139 in 0 : vector<1x8x8xf32>, vector<1x8x8xf32>, vector<1x8x8xf32>, vector<1x8x8xf32> -> vector<4x8x8xf32>
    %141 = vector.extract_strided_slice %126 {offsets = [0, 0], sizes = [10, 8], strides = [1, 1]} : vector<10x32xf32> to vector<10x8xf32>
    %142 = vector.extract_strided_slice %126 {offsets = [0, 8], sizes = [10, 8], strides = [1, 1]} : vector<10x32xf32> to vector<10x8xf32>
    %143 = vector.extract_strided_slice %126 {offsets = [0, 16], sizes = [10, 8], strides = [1, 1]} : vector<10x32xf32> to vector<10x8xf32>
    %144 = vector.extract_strided_slice %126 {offsets = [0, 24], sizes = [10, 8], strides = [1, 1]} : vector<10x32xf32> to vector<10x8xf32>
    %145 = vector.shape_cast %141 : vector<10x8xf32> to vector<1x10x8xf32>
    %146 = vector.shape_cast %142 : vector<10x8xf32> to vector<1x10x8xf32>
    %147 = vector.shape_cast %143 : vector<10x8xf32> to vector<1x10x8xf32>
    %148 = vector.shape_cast %144 : vector<10x8xf32> to vector<1x10x8xf32>
    %149 = tpu.concatenate %145, %146, %147, %148 in 0 : vector<1x10x8xf32>, vector<1x10x8xf32>, vector<1x10x8xf32>, vector<1x10x8xf32> -> vector<4x10x8xf32>
    %150 = vector.extract_strided_slice %131 {offsets = [0, 0], sizes = [10, 8], strides = [1, 1]} : vector<10x32xf32> to vector<10x8xf32>
    %151 = vector.extract_strided_slice %131 {offsets = [0, 8], sizes = [10, 8], strides = [1, 1]} : vector<10x32xf32> to vector<10x8xf32>
    %152 = vector.extract_strided_slice %131 {offsets = [0, 16], sizes = [10, 8], strides = [1, 1]} : vector<10x32xf32> to vector<10x8xf32>
    %153 = vector.extract_strided_slice %131 {offsets = [0, 24], sizes = [10, 8], strides = [1, 1]} : vector<10x32xf32> to vector<10x8xf32>
    %154 = vector.shape_cast %150 : vector<10x8xf32> to vector<1x10x8xf32>
    %155 = vector.shape_cast %151 : vector<10x8xf32> to vector<1x10x8xf32>
    %156 = vector.shape_cast %152 : vector<10x8xf32> to vector<1x10x8xf32>
    %157 = vector.shape_cast %153 : vector<10x8xf32> to vector<1x10x8xf32>
    %158 = tpu.concatenate %154, %155, %156, %157 in 0 : vector<1x10x8xf32>, vector<1x10x8xf32>, vector<1x10x8xf32>, vector<1x10x8xf32> -> vector<4x10x8xf32>
    "tpu.trace_start"() <{level = 10 : i32, message = "htd,hsd->hts"}> : () -> ()
    %cst_46 = arith.constant dense<0.000000e+00> : vector<4x8x10xf32>
    %159 = tpu.matmul %140, %149, %cst_46 {dimension_numbers = #tpu.dot_dimension_numbers<[2], [2], [1], [1], [0, 0, 0, 1, 1, 1], [0], [0]>} : vector<4x8x8xf32>, vector<4x10x8xf32>, vector<4x8x10xf32> -> vector<4x8x10xf32>
    "tpu.trace_stop"() : () -> ()
    %cst_47 = arith.constant 0.353553385 : f32
    %160 = vector.broadcast %cst_47 : f32 to vector<4x8x10xf32>
    %161 = arith.mulf %159, %160 : vector<4x8x10xf32>
    %cst_48 = arith.constant dense<0xFF800000> : vector<4x8xf32>
    %162 = vector.multi_reduction <maximumf>, %161, %cst_48 [2] : vector<4x8x10xf32> to vector<4x8xf32>
    %163 = vector.shape_cast %162 : vector<4x8xf32> to vector<4x8x1xf32>
    %164 = vector.broadcast %163 : vector<4x8x1xf32> to vector<4x8x10xf32>
    %165 = arith.subf %161, %164 : vector<4x8x10xf32>
    %166 = math.exp %165 : vector<4x8x10xf32>
    %cst_49 = arith.constant dense<0.000000e+00> : vector<4x8xf32>
    %167 = vector.multi_reduction <add>, %166, %cst_49 [2] : vector<4x8x10xf32> to vector<4x8xf32>
    %168 = vector.shape_cast %167 : vector<4x8xf32> to vector<4x8x1xf32>
    %169 = tpu.reciprocal %168 {approx = true} : vector<4x8x1xf32> -> vector<4x8x1xf32>
    %170 = vector.broadcast %169 : vector<4x8x1xf32> to vector<4x8x10xf32>
    %171 = arith.mulf %166, %170 : vector<4x8x10xf32>
    "tpu.trace_start"() <{level = 10 : i32, message = "hts,hsd->htd"}> : () -> ()
    %cst_50 = arith.constant dense<0.000000e+00> : vector<4x8x8xf32>
    %172 = tpu.matmul %171, %158, %cst_50 {dimension_numbers = #tpu.dot_dimension_numbers<[2], [1], [1], [2], [0, 0, 0, 1, 1, 2], [0], [0]>} : vector<4x8x10xf32>, vector<4x10x8xf32>, vector<4x8x8xf32> -> vector<4x8x8xf32>
    "tpu.trace_stop"() : () -> ()
    %173 = vector.extract_strided_slice %172 {offsets = [0, 0, 0], sizes = [1, 8, 8], strides = [1, 1, 1]} : vector<4x8x8xf32> to vector<1x8x8xf32>
    %174 = vector.shape_cast %173 : vector<1x8x8xf32> to vector<8x8xf32>
    %175 = vector.extract_strided_slice %172 {offsets = [1, 0, 0], sizes = [1, 8, 8], strides = [1, 1, 1]} : vector<4x8x8xf32> to vector<1x8x8xf32>
    %176 = vector.shape_cast %175 : vector<1x8x8xf32> to vector<8x8xf32>
    %177 = vector.extract_strided_slice %172 {offsets = [2, 0, 0], sizes = [1, 8, 8], strides = [1, 1, 1]} : vector<4x8x8xf32> to vector<1x8x8xf32>
    %178 = vector.shape_cast %177 : vector<1x8x8xf32> to vector<8x8xf32>
    %179 = vector.extract_strided_slice %172 {offsets = [3, 0, 0], sizes = [1, 8, 8], strides = [1, 1, 1]} : vector<4x8x8xf32> to vector<1x8x8xf32>
    %180 = vector.shape_cast %179 : vector<1x8x8xf32> to vector<8x8xf32>
    %181 = tpu.concatenate %174, %176, %178, %180 in 1 : vector<8x8xf32>, vector<8x8xf32>, vector<8x8xf32>, vector<8x8xf32> -> vector<8x32xf32>
    %182 = arith.truncf %181 : vector<8x32xf32> to vector<8x32xbf16>
    %c0_51 = arith.constant 0 : index
    %c128 = arith.constant 128 : index
    %c0_52 = arith.constant 0 : index
    %183 = vector.load %arg4[%c0_51, %c128, %c0_52] : memref<1x256x96xbf16, #tpu.memory_space<vmem>>, vector<1x32x32xbf16>
    %184 = vector.shape_cast %183 : vector<1x32x32xbf16> to vector<32x32xbf16>
    %cst_53 = arith.constant dense<0.000000e+00> : vector<8x32xf32>
    %185 = tpu.matmul %182, %184, %cst_53 {dimension_numbers = #tpu.dot_dimension_numbers<[1], [0], [0], [1], [0, 0, 1, 1], [], []>} : vector<8x32xbf16>, vector<32x32xbf16>, vector<8x32xf32> -> vector<8x32xf32>
    %c0_54 = arith.constant 0 : index
    %c7 = arith.constant 7 : index
    %c0_55 = arith.constant 0 : index
    %186 = vector.load %arg5[%c0_54, %c7, %c0_55] : memref<1x16x64xf32, #tpu.memory_space<vmem>>, vector<1x1x32xf32>
    %187 = vector.shape_cast %186 : vector<1x1x32xf32> to vector<1x32xf32>
    %188 = vector.broadcast %187 : vector<1x32xf32> to vector<8x32xf32>
    %189 = arith.addf %185, %188 : vector<8x32xf32>
    %190 = arith.addf %107, %189 : vector<8x32xf32>
    %c0_56 = arith.constant 0 : index
    %c12 = arith.constant 12 : index
    %c0_57 = arith.constant 0 : index
    %191 = vector.load %arg5[%c0_56, %c12, %c0_57] : memref<1x16x64xf32, #tpu.memory_space<vmem>>, vector<1x1x32xf32>
    %192 = vector.shape_cast %191 : vector<1x1x32xf32> to vector<1x32xf32>
    %c0_58 = arith.constant 0 : index
    %c13 = arith.constant 13 : index
    %c0_59 = arith.constant 0 : index
    %193 = vector.load %arg5[%c0_58, %c13, %c0_59] : memref<1x16x64xf32, #tpu.memory_space<vmem>>, vector<1x1x32xf32>
    %194 = vector.shape_cast %193 : vector<1x1x32xf32> to vector<1x32xf32>
    %cst_60 = arith.constant dense<0.000000e+00> : vector<8xf32>
    %195 = vector.multi_reduction <add>, %190, %cst_60 [1] : vector<8x32xf32> to vector<8xf32>
    %196 = vector.shape_cast %195 : vector<8xf32> to vector<8x1xf32>
    %cst_61 = arith.constant 3.200000e+01 : f32
    %197 = vector.broadcast %cst_61 : f32 to vector<8x1xf32>
    %198 = arith.divf %196, %197 : vector<8x1xf32>
    %199 = vector.broadcast %198 : vector<8x1xf32> to vector<8x32xf32>
    %200 = arith.subf %190, %199 : vector<8x32xf32>
    %201 = arith.mulf %200, %200 : vector<8x32xf32>
    %cst_62 = arith.constant dense<0.000000e+00> : vector<8xf32>
    %202 = vector.multi_reduction <add>, %201, %cst_62 [1] : vector<8x32xf32> to vector<8xf32>
    %203 = vector.shape_cast %202 : vector<8xf32> to vector<8x1xf32>
    %cst_63 = arith.constant 3.200000e+01 : f32
    %204 = vector.broadcast %cst_63 : f32 to vector<8x1xf32>
    %205 = arith.divf %203, %204 : vector<8x1xf32>
    %206 = vector.broadcast %198 : vector<8x1xf32> to vector<8x32xf32>
    %207 = arith.subf %190, %206 : vector<8x32xf32>
    %cst_64 = arith.constant 9.99999974E-6 : f32
    %208 = vector.broadcast %cst_64 : f32 to vector<8x1xf32>
    %209 = arith.addf %205, %208 : vector<8x1xf32>
    %210 = math.rsqrt %209 : vector<8x1xf32>
    %211 = vector.broadcast %210 : vector<8x1xf32> to vector<8x32xf32>
    %212 = arith.mulf %207, %211 : vector<8x32xf32>
    %213 = vector.broadcast %192 : vector<1x32xf32> to vector<8x32xf32>
    %214 = arith.mulf %212, %213 : vector<8x32xf32>
    %215 = vector.broadcast %194 : vector<1x32xf32> to vector<8x32xf32>
    %216 = arith.addf %214, %215 : vector<8x32xf32>
    %217 = arith.truncf %216 : vector<8x32xf32> to vector<8x32xbf16>
    %c0_65 = arith.constant 0 : index
    %c160 = arith.constant 160 : index
    %c0_66 = arith.constant 0 : index
    %218 = vector.load %arg4[%c0_65, %c160, %c0_66] : memref<1x256x96xbf16, #tpu.memory_space<vmem>>, vector<1x32x64xbf16>
    %219 = vector.shape_cast %218 : vector<1x32x64xbf16> to vector<32x64xbf16>
    %cst_67 = arith.constant dense<0.000000e+00> : vector<8x64xf32>
    %220 = tpu.matmul %217, %219, %cst_67 {dimension_numbers = #tpu.dot_dimension_numbers<[1], [0], [0], [1], [0, 0, 1, 1], [], []>} : vector<8x32xbf16>, vector<32x64xbf16>, vector<8x64xf32> -> vector<8x64xf32>
    %c0_68 = arith.constant 0 : index
    %c8 = arith.constant 8 : index
    %c0_69 = arith.constant 0 : index
    %221 = vector.load %arg5[%c0_68, %c8, %c0_69] : memref<1x16x64xf32, #tpu.memory_space<vmem>>, vector<1x1x64xf32>
    %222 = vector.shape_cast %221 : vector<1x1x64xf32> to vector<1x64xf32>
    %223 = vector.broadcast %222 : vector<1x64xf32> to vector<8x64xf32>
    %224 = arith.addf %220, %223 : vector<8x64xf32>
    %cst_70 = arith.constant 0.000000e+00 : f32
    %225 = vector.broadcast %cst_70 : f32 to vector<8x64xf32>
    %226 = arith.maximumf %224, %225 : vector<8x64xf32>
    %227 = arith.truncf %226 : vector<8x64xf32> to vector<8x64xbf16>
    %c0_71 = arith.constant 0 : index
    %c192 = arith.constant 192 : index
    %c0_72 = arith.constant 0 : index
    %228 = vector.load %arg4[%c0_71, %c192, %c0_72] : memref<1x256x96xbf16, #tpu.memory_space<vmem>>, vector<1x64x32xbf16>
    %229 = vector.shape_cast %228 : vector<1x64x32xbf16> to vector<64x32xbf16>
    %cst_73 = arith.constant dense<0.000000e+00> : vector<8x32xf32>
    %230 = tpu.matmul %227, %229, %cst_73 {dimension_numbers = #tpu.dot_dimension_numbers<[1], [0], [0], [1], [0, 0, 1, 1], [], []>} : vector<8x64xbf16>, vector<64x32xbf16>, vector<8x32xf32> -> vector<8x32xf32>
    %c0_74 = arith.constant 0 : index
    %c9 = arith.constant 9 : index
    %c0_75 = arith.constant 0 : index
    %231 = vector.load %arg5[%c0_74, %c9, %c0_75] : memref<1x16x64xf32, #tpu.memory_space<vmem>>, vector<1x1x32xf32>
    %232 = vector.shape_cast %231 : vector<1x1x32xf32> to vector<1x32xf32>
    %233 = vector.broadcast %232 : vector<1x32xf32> to vector<8x32xf32>
    %234 = arith.addf %230, %233 : vector<8x32xf32>
    %235 = arith.addf %216, %234 : vector<8x32xf32>
    %c0_76 = arith.constant 0 : index
    %c14 = arith.constant 14 : index
    %c0_77 = arith.constant 0 : index
    %236 = vector.load %arg5[%c0_76, %c14, %c0_77] : memref<1x16x64xf32, #tpu.memory_space<vmem>>, vector<1x1x32xf32>
    %237 = vector.shape_cast %236 : vector<1x1x32xf32> to vector<1x32xf32>
    %c0_78 = arith.constant 0 : index
    %c15 = arith.constant 15 : index
    %c0_79 = arith.constant 0 : index
    %238 = vector.load %arg5[%c0_78, %c15, %c0_79] : memref<1x16x64xf32, #tpu.memory_space<vmem>>, vector<1x1x32xf32>
    %239 = vector.shape_cast %238 : vector<1x1x32xf32> to vector<1x32xf32>
    %cst_80 = arith.constant dense<0.000000e+00> : vector<8xf32>
    %240 = vector.multi_reduction <add>, %235, %cst_80 [1] : vector<8x32xf32> to vector<8xf32>
    %241 = vector.shape_cast %240 : vector<8xf32> to vector<8x1xf32>
    %cst_81 = arith.constant 3.200000e+01 : f32
    %242 = vector.broadcast %cst_81 : f32 to vector<8x1xf32>
    %243 = arith.divf %241, %242 : vector<8x1xf32>
    %244 = vector.broadcast %243 : vector<8x1xf32> to vector<8x32xf32>
    %245 = arith.subf %235, %244 : vector<8x32xf32>
    %246 = arith.mulf %245, %245 : vector<8x32xf32>
    %cst_82 = arith.constant dense<0.000000e+00> : vector<8xf32>
    %247 = vector.multi_reduction <add>, %246, %cst_82 [1] : vector<8x32xf32> to vector<8xf32>
    %248 = vector.shape_cast %247 : vector<8xf32> to vector<8x1xf32>
    %cst_83 = arith.constant 3.200000e+01 : f32
    %249 = vector.broadcast %cst_83 : f32 to vector<8x1xf32>
    %250 = arith.divf %248, %249 : vector<8x1xf32>
    %251 = vector.broadcast %243 : vector<8x1xf32> to vector<8x32xf32>
    %252 = arith.subf %235, %251 : vector<8x32xf32>
    %cst_84 = arith.constant 9.99999974E-6 : f32
    %253 = vector.broadcast %cst_84 : f32 to vector<8x1xf32>
    %254 = arith.addf %250, %253 : vector<8x1xf32>
    %255 = math.rsqrt %254 : vector<8x1xf32>
    %256 = vector.broadcast %255 : vector<8x1xf32> to vector<8x32xf32>
    %257 = arith.mulf %252, %256 : vector<8x32xf32>
    %258 = vector.broadcast %237 : vector<1x32xf32> to vector<8x32xf32>
    %259 = arith.mulf %257, %258 : vector<8x32xf32>
    %260 = vector.broadcast %239 : vector<1x32xf32> to vector<8x32xf32>
    %261 = arith.addf %259, %260 : vector<8x32xf32>
    %c0_85 = arith.constant 0 : index
    %c0_86 = arith.constant 0 : index
    %262 = vector.load %arg9[%c0_85, %c0_86] : memref<8x32xf32, #tpu.memory_space<vmem>>, vector<8x32xf32>
    tpu.vector_store %arg9[%c0_85, %c0_86], %261 {strides = array<i32>} : memref<8x32xf32, #tpu.memory_space<vmem>>, vector<8x32xf32>,
    %c1_i32 = arith.constant 1 : i32
    %263 = arith.cmpi eq, %arg1, %c1_i32 : i32
    %264 = arith.extui %263 : i1 to i32
    %c0_i32_87 = arith.constant 0 : i32
    %265 = arith.cmpi ne, %264, %c0_i32_87 : i32
    scf.if %265 {
      %266 = arith.truncf %261 : vector<8x32xf32> to vector<8x32xbf16>
      %c0_88 = arith.constant 0 : index
      %c0_89 = arith.constant 0 : index
      %267 = vector.load %arg6[%c0_88, %c0_89] : memref<32x128xbf16, #tpu.memory_space<vmem>>, vector<32x128xbf16>
      %cst_90 = arith.constant dense<0.000000e+00> : vector<8x128xf32>
      %268 = tpu.matmul %266, %267, %cst_90 {dimension_numbers = #tpu.dot_dimension_numbers<[1], [0], [0], [1], [0, 0, 1, 1], [], []>} : vector<8x32xbf16>, vector<32x128xbf16>, vector<8x128xf32> -> vector<8x128xf32>
      %c0_91 = arith.constant 0 : index
      %c0_92 = arith.constant 0 : index
      %269 = vector.load %arg7[%c0_91, %c0_92] : memref<1x128xf32, #tpu.memory_space<vmem>>, vector<1x128xf32>
      %270 = vector.broadcast %269 : vector<1x128xf32> to vector<8x128xf32>
      %271 = arith.addf %268, %270 : vector<8x128xf32>
      %c0_93 = arith.constant 0 : index
      %c0_94 = arith.constant 0 : index
      %c0_95 = arith.constant 0 : index
      %272 = vector.load %arg8[%c0_93, %c0_94, %c0_95] : memref<1x8x128xf32, #tpu.memory_space<vmem>>, vector<1x8x128xf32>
      %273 = vector.shape_cast %272 : vector<1x8x128xf32> to vector<8x128xf32>
      %274 = vector.shape_cast %271 : vector<8x128xf32> to vector<1x8x128xf32>
      tpu.vector_store %arg8[%c0_93, %c0_94, %c0_95], %274 {strides = array<i32>} : memref<1x8x128xf32, #tpu.memory_space<vmem>>, vector<1x8x128xf32>,
    } else {
    }
    return
  }
  func.func @transform_0(%arg0: i32, %arg1: i32) -> (i32, i32, i32) {
    %c0_i32 = arith.constant 0 : i32
    %c0_i32_0 = arith.constant 0 : i32
    %c0_i32_1 = arith.constant 0 : i32
    return %arg0, %c0_i32, %c0_i32_0 : i32, i32, i32
  }
  func.func @transform_1(%arg0: i32, %arg1: i32) -> (i32, i32, i32) {
    %c0_i32 = arith.constant 0 : i32
    %c0_i32_0 = arith.constant 0 : i32
    %c0_i32_1 = arith.constant 0 : i32
    return %arg0, %c0_i32, %c0_i32_0 : i32, i32, i32
  }
  func.func @transform_2(%arg0: i32, %arg1: i32) -> (i32, i32, i32) {
    %c0_i32 = arith.constant 0 : i32
    %c0_i32_0 = arith.constant 0 : i32
    %c0_i32_1 = arith.constant 0 : i32
    return %arg1, %c0_i32, %c0_i32_0 : i32, i32, i32
  }
  func.func @transform_3(%arg0: i32, %arg1: i32) -> (i32, i32, i32) {
    %c0_i32 = arith.constant 0 : i32
    %c0_i32_0 = arith.constant 0 : i32
    %c0_i32_1 = arith.constant 0 : i32
    return %arg1, %c0_i32, %c0_i32_0 : i32, i32, i32
  }
  func.func @transform_4(%arg0: i32, %arg1: i32) -> (i32, i32) {
    %c0_i32 = arith.constant 0 : i32
    %c0_i32_0 = arith.constant 0 : i32
    %c0_i32_1 = arith.constant 0 : i32
    return %c0_i32, %c0_i32_0 : i32, i32
  }
  func.func @transform_5(%arg0: i32, %arg1: i32) -> (i32, i32) {
    %c0_i32 = arith.constant 0 : i32
    %c0_i32_0 = arith.constant 0 : i32
    %c0_i32_1 = arith.constant 0 : i32
    return %c0_i32, %c0_i32_0 : i32, i32
  }
  func.func @transform_6(%arg0: i32, %arg1: i32) -> (i32, i32, i32) {
    %c0_i32 = arith.constant 0 : i32
    %c0_i32_0 = arith.constant 0 : i32
    %c0_i32_1 = arith.constant 0 : i32
    return %arg0, %c0_i32, %c0_i32_0 : i32, i32, i32
  }
}

</mosaic_0001>

<llo_original>
// kernel: decoder_forward.1
$region0: #{decoder_forward.1}
  #allocation0 [shape = 'u32[]', space=smem, size = 0x4, offset = 0x4, fixed_abs, tag = 'smem constant byte address 0x4 - core index']
  #allocation1 [shape = 'u32[72,128]{1,0:T(1,128)}', space=vmem, size = 0x9000, scoped, tag = 'internal scratch']
  #allocation2 [shape = 'f32[8,32]{1,0:T(8,128)}', space=vmem, size = 0x1000, scoped, tag = 'scratch operand']
  %s0 = inlined_call_operand.vmem [shape: f32[2,8,32], index: 0, kind: input, shape index: {}]
  %s1 = inlined_call_operand.vmem [shape: f32[2,10,32], index: 1, kind: input, shape index: {}]
  %s2 = inlined_call_operand.vmem [shape: bf16[2,256,96], index: 2, kind: input, shape index: {}]
  %s3 = inlined_call_operand.vmem [shape: f32[2,16,64], index: 3, kind: input, shape index: {}]
  %s4 = inlined_call_operand.vmem [shape: bf16[32,128], index: 4, kind: input, shape index: {}]
  %s5 = inlined_call_operand.vmem [shape: f32[1,128], index: 5, kind: input, shape index: {}]
  %s6 = inlined_call_operand.hbm [shape: f32[2,8,128], index: 6, kind: output, shape index: {}]
  %s7 = sld [smem:[#allocation0]]
  $region65: #{decoder_forward.1} parent=0
    _
  %s9 = ssub.s32 1, %s7
  %s10 = scalar_select 0, %s9, %s7
  $region1: #{decoder_forward.1} parent=0
    #allocation3 [shape = 'u8[8192]{0}', space=vmem, size = 0x2000, scoped, tag = 'output window, operand 0']
    #allocation4 [shape = 's32[2]{0}', space=sflag, size = 0x8, scoped, tag = 'scoped memory for decoder_forward.1']
    %11 = vsyncpa [#allocation4], 0
    %s12 = scalar_lea.sflag [#allocation4], 1
    %13 = vsyncpa %s12, 0
    loop: start=0, step=1, limit=6
    $region2: #{decoder_forward.1} parent=1 // loop_pre_header
      _
    $region3: #{decoder_forward.1} parent=1 // loop_header
      %s15 = sphi 0, %s19
      %p16 = scmp.ge.s32.totalorder %s15, 6
      %s22 = sphi 0, %s34
      %s23 = sphi 0, %s30
      %s24 = sphi 0, %s22
      %s25 = sphi 0, %s23
      %s26 = sphi 0, %s24
      %s27 = sphi 0, %s25
      %s37 = sphi 0, %s39
      %s40 = sphi 0, %s37
      %s41 = sphi 0, %s40
      %s57 = sphi 0, %s41
      %s63 = sphi 0, %s65
      %s66 = sphi 0, %s63
      %s67 = sphi 0, %s66
      %s83 = sphi 0, %s67
      %s89 = sphi 0, %s91
      %s92 = sphi 0, %s89
      %s93 = sphi 0, %s92
      %s109 = sphi 0, %s93
      %s115 = sphi 0, %s117
      %s118 = sphi 0, %s115
      %s119 = sphi 0, %s118
      %s135 = sphi 0, %s119
      %s139 = sphi 0, %s139
      %s141 = sphi 0, %s139
      %s142 = sphi 0, %s141
      %s156 = sphi 0, %s142
      %s160 = sphi 0, %s160
      %s162 = sphi 0, %s160
      %s163 = sphi 0, %s162
      %s177 = sphi 0, %s163
      %s183 = sphi 0, %s185
      %s186 = sphi 0, %s183
      %s187 = sphi 0, %s186
      %s203 = sphi 0, %s187
    $region4: #{decoder_forward.1} parent=1 // loop_header_branch
      %18 = sbr.rel (%p16) target = $region8
    $region5: #{decoder_forward.1} parent=1 // loop_body
      %s20 = ssub.s32 %s15, 1
      %s21 = ssub.s32 %s15, 2
      %s28 = sadd.s32 1, %s23
      %p29 = scmp.ge.s32.totalorder %s28, 2
      %s30 = scalar_select %p29, 0, %s28
      %s31 = sadd.s32 1, %s22
      %s32 = scalar_select %p29, %s31, %s22
      %p33 = scmp.ge.s32.totalorder %s32, 2
      %s34 = scalar_select %p33, 0, %s32
      %s35 = ssub.s32 %s22, %s34
      %p36 = scmp.eq.s32.totalorder %s35, 0
      %s38 = sadd.s32 %s37, 1
      %s39 = scalar_select %p36, %s37, %s38
      %p42 = pneg %p36
      %p43 = scmp.eq.s32.totalorder %s15, 3
      %p44 = por %p42, %p43
      %p45 = scmp.ne.s32.totalorder %s37, %s40
      %p46 = scmp.eq.s32.totalorder %s15, 0
      %p47 = por %p45, %p46
      %p48 = scmp.ne.s32.totalorder %s37, %s40
      %p49 = scmp.eq.s32.totalorder %s20, 3
      %p50 = por %p48, %p49
      %p51 = scmp.ne.s32.totalorder %s40, %s41
      %p52 = scmp.eq.s32.totalorder %s20, 0
      %p53 = por %p51, %p52
      %p54 = scmp.ne.s32.totalorder %s40, %s41
      %p55 = scmp.eq.s32.totalorder %s21, 3
      %p56 = por %p54, %p55
      %p58 = scmp.ne.s32.totalorder %s41, %s57
      %p59 = scmp.eq.s32.totalorder %s21, 0
      %p60 = por %p58, %p59
      %s61 = ssub.s32 %s22, %s34
      %p62 = scmp.eq.s32.totalorder %s61, 0
      %s64 = sadd.s32 %s63, 1
      %s65 = scalar_select %p62, %s63, %s64
      %p68 = pneg %p62
      %p69 = scmp.eq.s32.totalorder %s15, 3
      %p70 = por %p68, %p69
      %p71 = scmp.ne.s32.totalorder %s63, %s66
      %p72 = scmp.eq.s32.totalorder %s15, 0
      %p73 = por %p71, %p72
      %p74 = scmp.ne.s32.totalorder %s63, %s66
      %p75 = scmp.eq.s32.totalorder %s20, 3
      %p76 = por %p74, %p75
      %p77 = scmp.ne.s32.totalorder %s66, %s67
      %p78 = scmp.eq.s32.totalorder %s20, 0
      %p79 = por %p77, %p78
      %p80 = scmp.ne.s32.totalorder %s66, %s67
      %p81 = scmp.eq.s32.totalorder %s21, 3
      %p82 = por %p80, %p81
      %p84 = scmp.ne.s32.totalorder %s67, %s83
      %p85 = scmp.eq.s32.totalorder %s21, 0
      %p86 = por %p84, %p85
      %s87 = ssub.s32 %s23, %s30
      %p88 = scmp.eq.s32.totalorder %s87, 0
      %s90 = sadd.s32 %s89, 1
      %s91 = scalar_select %p88, %s89, %s90
      %p94 = pneg %p88
      %p95 = scmp.eq.s32.totalorder %s15, 3
      %p96 = por %p94, %p95
      %p97 = scmp.ne.s32.totalorder %s89, %s92
      %p98 = scmp.eq.s32.totalorder %s15, 0
      %p99 = por %p97, %p98
      %p100 = scmp.ne.s32.totalorder %s89, %s92
      %p101 = scmp.eq.s32.totalorder %s20, 3
      %p102 = por %p100, %p101
      %p103 = scmp.ne.s32.totalorder %s92, %s93
      %p104 = scmp.eq.s32.totalorder %s20, 0
      %p105 = por %p103, %p104
      %p106 = scmp.ne.s32.totalorder %s92, %s93
      %p107 = scmp.eq.s32.totalorder %s21, 3
      %p108 = por %p106, %p107
      %p110 = scmp.ne.s32.totalorder %s93, %s109
      %p111 = scmp.eq.s32.totalorder %s21, 0
      %p112 = por %p110, %p111
      %s113 = ssub.s32 %s23, %s30
      %p114 = scmp.eq.s32.totalorder %s113, 0
      %s116 = sadd.s32 %s115, 1
      %s117 = scalar_select %p114, %s115, %s116
      %p120 = pneg %p114
      %p121 = scmp.eq.s32.totalorder %s15, 3
      %p122 = por %p120, %p121
      %p123 = scmp.ne.s32.totalorder %s115, %s118
      %p124 = scmp.eq.s32.totalorder %s15, 0
      %p125 = por %p123, %p124
      %p126 = scmp.ne.s32.totalorder %s115, %s118
      %p127 = scmp.eq.s32.totalorder %s20, 3
      %p128 = por %p126, %p127
      %p129 = scmp.ne.s32.totalorder %s118, %s119
      %p130 = scmp.eq.s32.totalorder %s20, 0
      %p131 = por %p129, %p130
      %p132 = scmp.ne.s32.totalorder %s118, %s119
      %p133 = scmp.eq.s32.totalorder %s21, 3
      %p134 = por %p132, %p133
      %p136 = scmp.ne.s32.totalorder %s119, %s135
      %p137 = scmp.eq.s32.totalorder %s21, 0
      %p138 = por %p136, %p137
      %s140 = sadd.s32 %s139, 1
      %p143 = scmp.eq.s32.totalorder %s15, 3
      %p144 = scmp.ne.s32.totalorder %s139, %s141
      %p145 = scmp.eq.s32.totalorder %s15, 0
      %p146 = por %p144, %p145
      %p147 = scmp.ne.s32.totalorder %s139, %s141
      %p148 = scmp.eq.s32.totalorder %s20, 3
      %p149 = por %p147, %p148
      %p150 = scmp.ne.s32.totalorder %s141, %s142
      %p151 = scmp.eq.s32.totalorder %s20, 0
      %p152 = por %p150, %p151
      %p153 = scmp.ne.s32.totalorder %s141, %s142
      %p154 = scmp.eq.s32.totalorder %s21, 3
      %p155 = por %p153, %p154
      %p157 = scmp.ne.s32.totalorder %s142, %s156
      %p158 = scmp.eq.s32.totalorder %s21, 0
      %p159 = por %p157, %p158
      %s161 = sadd.s32 %s160, 1
      %p164 = scmp.eq.s32.totalorder %s15, 3
      %p165 = scmp.ne.s32.totalorder %s160, %s162
      %p166 = scmp.eq.s32.totalorder %s15, 0
      %p167 = por %p165, %p166
      %p168 = scmp.ne.s32.totalorder %s160, %s162
      %p169 = scmp.eq.s32.totalorder %s20, 3
      %p170 = por %p168, %p169
      %p171 = scmp.ne.s32.totalorder %s162, %s163
      %p172 = scmp.eq.s32.totalorder %s20, 0
      %p173 = por %p171, %p172
      %p174 = scmp.ne.s32.totalorder %s162, %s163
      %p175 = scmp.eq.s32.totalorder %s21, 3
      %p176 = por %p174, %p175
      %p178 = scmp.ne.s32.totalorder %s163, %s177
      %p179 = scmp.eq.s32.totalorder %s21, 0
      %p180 = por %p178, %p179
      %s181 = ssub.s32 %s22, %s34
      %p182 = scmp.eq.s32.totalorder %s181, 0
      %s184 = sadd.s32 %s183, 1
      %s185 = scalar_select %p182, %s183, %s184
      %p188 = pneg %p182
      %p189 = scmp.eq.s32.totalorder %s15, 3
      %p190 = por %p188, %p189
      %p191 = scmp.ne.s32.totalorder %s183, %s186
      %p192 = scmp.eq.s32.totalorder %s15, 0
      %p193 = por %p191, %p192
      %p194 = scmp.ne.s32.totalorder %s183, %s186
      %p195 = scmp.eq.s32.totalorder %s20, 3
      %p196 = por %p194, %p195
      %p197 = scmp.ne.s32.totalorder %s186, %s187
      %p198 = scmp.eq.s32.totalorder %s20, 0
      %p199 = por %p197, %p198
      %p200 = scmp.ne.s32.totalorder %s186, %s187
      %p201 = scmp.eq.s32.totalorder %s21, 3
      %p202 = por %p200, %p201
      %p204 = scmp.ne.s32.totalorder %s187, %s203
      %p205 = scmp.eq.s32.totalorder %s21, 0
      %p206 = por %p204, %p205
      %p207 = scmp.le.s32.totalorder 1, %s15
      %p208 = scmp.lt.s32.totalorder %s15, 5
      %p209 = pnand %p207, %p208
      %p210 = pneg %p209
      // Predicated region
      $region9: #{decoder_forward.1} parent=5 // pred_check
        _
      $region10: #{decoder_forward.1} parent=5 // pred_check_branch
        %212 = sbr.rel (%p209) target = $region12
      $region11: #{decoder_forward.1} parent=5 // pred_region
        %s213 = ssub.s32 %s15, 1
        // Predicated region
        $region13: #{decoder_forward.1} parent=11 // pred_check
          %p214 = pneg %p152
        $region14: #{decoder_forward.1} parent=11 // pred_check_branch
          %216 = sbr.rel (%p214) target = $region16
        $region15: #{decoder_forward.1} parent=11 // pred_region
          _
        $region16: #{decoder_forward.1} parent=11 // pred_fallthru
          _
        // Predicated region
        $region17: #{decoder_forward.1} parent=11 // pred_check
          %p217 = pneg %p173
        $region18: #{decoder_forward.1} parent=11 // pred_check_branch
          %219 = sbr.rel (%p217) target = $region20
        $region19: #{decoder_forward.1} parent=11 // pred_region
          _
        $region20: #{decoder_forward.1} parent=11 // pred_fallthru
          _
      $region12: #{decoder_forward.1} parent=5 // pred_fallthru
        _
      %p220 = scmp.lt.s32.totalorder %s15, 4
      // Predicated region
      $region21: #{decoder_forward.1} parent=5 // pred_check
        %p221 = pneg %p220
      $region22: #{decoder_forward.1} parent=5 // pred_check_branch
        %223 = sbr.rel (%p221) target = $region24
      $region23: #{decoder_forward.1} parent=5 // pred_region
        // Predicated region
        $region25: #{decoder_forward.1} parent=23 // pred_check
          %p224 = pneg %p47
        $region26: #{decoder_forward.1} parent=23 // pred_check_branch
          %226 = sbr.rel (%p224) target = $region28
        $region27: #{decoder_forward.1} parent=23 // pred_region
          %p227 = scmp.lt.s32.totalorder %s22, 1
          %s228 = scalar_select %p227, %s22, 1
          %s229 = smul.addr %s228, 8
          %s230 = scalar_lea.vmem %s0, %s229
        $region28: #{decoder_forward.1} parent=23 // pred_fallthru
          _
        // Predicated region
        $region29: #{decoder_forward.1} parent=23 // pred_check
          %p231 = pneg %p73
        $region30: #{decoder_forward.1} parent=23 // pred_check_branch
          %233 = sbr.rel (%p231) target = $region32
        $region31: #{decoder_forward.1} parent=23 // pred_region
          %p234 = scmp.lt.s32.totalorder %s22, 1
          %s235 = scalar_select %p234, %s22, 1
          %s236 = smul.addr %s235, 2
          %s237 = smul.addr %s236, 8
          %s238 = scalar_lea.vmem %s1, %s237
        $region32: #{decoder_forward.1} parent=23 // pred_fallthru
          _
        // Predicated region
        $region33: #{decoder_forward.1} parent=23 // pred_check
          %p239 = pneg %p99
        $region34: #{decoder_forward.1} parent=23 // pred_check_branch
          %241 = sbr.rel (%p239) target = $region36
        $region35: #{decoder_forward.1} parent=23 // pred_region
          %p242 = scmp.lt.s32.totalorder %s23, 1
          %s243 = scalar_select %p242, %s23, 1
          %s244 = smul.addr %s243, 32
          %s245 = smul.addr %s244, 4
          %s246 = scalar_lea.vmem %s2, %s245
        $region36: #{decoder_forward.1} parent=23 // pred_fallthru
          _
        // Predicated region
        $region37: #{decoder_forward.1} parent=23 // pred_check
          %p247 = pneg %p125
        $region38: #{decoder_forward.1} parent=23 // pred_check_branch
          %249 = sbr.rel (%p247) target = $region40
        $region39: #{decoder_forward.1} parent=23 // pred_region
          %p250 = scmp.lt.s32.totalorder %s23, 1
          %s251 = scalar_select %p250, %s23, 1
          %s252 = smul.addr %s251, 2
          %s253 = smul.addr %s252, 8
          %s254 = scalar_lea.vmem %s3, %s253
        $region40: #{decoder_forward.1} parent=23 // pred_fallthru
          _
      $region24: #{decoder_forward.1} parent=5 // pred_fallthru
        _
      %p255 = scmp.le.s32.totalorder 1, %s15
      %p256 = scmp.lt.s32.totalorder %s15, 5
      %p257 = pnand %p255, %p256
      %p258 = pneg %p257
      // Predicated region
      $region41: #{decoder_forward.1} parent=5 // pred_check
        _
      $region42: #{decoder_forward.1} parent=5 // pred_check_branch
        %260 = sbr.rel (%p257) target = $region44
      $region43: #{decoder_forward.1} parent=5 // pred_region
        %s261 = ssub.s32 %s15, 1
        %p262 = scmp.lt.s32.totalorder %s24, 1
        %s263 = scalar_select %p262, %s24, 1
        %s264 = smul.addr %s263, 8
        %s265 = scalar_lea.vmem %s0, %s264
        %p266 = pneg %p53
        %p267 = pneg %p50
        %p268 = scmp.lt.s32.totalorder %s24, 1
        %s269 = scalar_select %p268, %s24, 1
        %s270 = smul.addr %s269, 2
        %s271 = smul.addr %s270, 8
        %s272 = scalar_lea.vmem %s1, %s271
        %p273 = pneg %p79
        %p274 = pneg %p76
        %p275 = scmp.lt.s32.totalorder %s25, 1
        %s276 = scalar_select %p275, %s25, 1
        %s277 = smul.addr %s276, 32
        %s278 = smul.addr %s277, 4
        %s279 = scalar_lea.vmem %s2, %s278
        %p280 = pneg %p105
        %p281 = pneg %p102
        %p282 = scmp.lt.s32.totalorder %s25, 1
        %s283 = scalar_select %p282, %s25, 1
        %s284 = smul.addr %s283, 2
        %s285 = smul.addr %s284, 8
        %s286 = scalar_lea.vmem %s3, %s285
        %p287 = pneg %p131
        %p288 = pneg %p128
        %p289 = pneg %p152
        %p290 = pneg %p149
        %p291 = pneg %p173
        %p292 = pneg %p170
        %p293 = pneg %p199
        %p294 = pneg %p196
        %s295 = sand.u32 %s186, 1
        %s296 = scalar_lea.sflag [#allocation4], %s295
        %s297 = sand.u32 %s186, 1
        %s298 = smul.addr %s297, 8
        %s299 = scalar_lea.vmem [#allocation3], %s298
        %p300 = scmp.lt.s32.totalorder %s24, 1
        %s301 = scalar_select %p300, %s24, 1
        %s302 = smul.addr %s301, 8
        %s303 = scalar_lea.vmem %s0, %s302
        %p304 = scmp.lt.s32.totalorder %s24, 1
        %s305 = scalar_select %p304, %s24, 1
        %s306 = smul.addr %s305, 2
        %s307 = smul.addr %s306, 8
        %s308 = scalar_lea.vmem %s1, %s307
        %p309 = scmp.lt.s32.totalorder %s25, 1
        %s310 = scalar_select %p309, %s25, 1
        %s311 = smul.addr %s310, 32
        %s312 = smul.addr %s311, 4
        %s313 = scalar_lea.vmem %s2, %s312
        %p314 = scmp.lt.s32.totalorder %s25, 1
        %s315 = scalar_select %p314, %s25, 1
        %s316 = smul.addr %s315, 2
        %s317 = smul.addr %s316, 8
        %s318 = scalar_lea.vmem %s3, %s317
        %p320 = scmp.eq.s32.totalorder %s25, 0
        // Predicated region
        $region45: #{decoder_forward.1} parent=43 // pred_check
          %p321 = pneg %p320
        $region46: #{decoder_forward.1} parent=43 // pred_check_branch
          %323 = sbr.rel (%p321) target = $region48
        $region47: #{decoder_forward.1} parent=43 // pred_region
          %v324 = vld [vmem:[%s303] sm:$0xff]
          %vm325 = vcmask 261120
          %326 = vst.msk [vmem:[#allocation2] sm:$0xff] %vm325, %v324
        $region48: #{decoder_forward.1} parent=43 // pred_fallthru
          _
        %v327 = vld [vmem:[#allocation2] sm:$0xff]
        %v328 = vpack.c.bf16 %v327, %v327
        %v329 = vld [vmem:[%s313] sm:$0xf]
        %v330 = vld [vmem:[%s313 + $0x4] sm:$0xf]
        %v331 = vld [vmem:[%s313 + $0x8] sm:$0xf]
        %v332 = vld [vmem:[%s313 + $0xc] sm:$0xf]
        %v337 = vunpack.c.l.b16 %v329
        %v338 = vunpack.c.l.b16 %v330
        %v339 = vunpack.c.l.b16 %v331
        %v340 = vunpack.c.l.b16 %v332
        %v341 = vpack.c.b16 %v338, %v337
        %v342 = vpack.c.b16 %v340, %v339
        %vm345 = vcmask 261120
        %v347 = vsel %vm345, %v328, 0
        %349 = vmatpush.bf16.msra.mxu0 0
        %350 = vmatpush.bf16.msra.mxu0 0
        %351 = vmatpush.bf16.msra.mxu0 0
        %352 = vmatpush.bf16.msra.mxu0 0
        %353 = vmatpush.bf16.msra.mxu0 0
        %354 = vmatpush.bf16.msra.mxu0 0
        %355 = vmatpush.bf16.msra.mxu0 %v342
        %356 = vmatpush.bf16.msra.mxu0 %v341
        %357 = vmatmul.bf16.gmra.mxu0 %v347
        %v358 = vpop.f32.mrf.mxu0
        %v359 = vadd.f32 0.0, %v358
        %v360 = vpop.f32.mrf.mxu0
        %361 = vdwg.mxu0
        %v362 = vld [vmem:[%s318] sm:$0x1]
        %v363 = vperm.slane %v362, 0
        %v364 = vadd.f32 %v359, %v363
        %v365 = vld [vmem:[%s318 + $0x1] sm:$0x1]
        %v366 = vperm.slane %v365, 0
        %368 = vrot.lane.b32.xlu0 %v366, 32
        %v369 = vpop.permute.xlu0 %368
        %v371 = vadd.f32 %v359, %v369
        %v372 = vld [vmem:[%s318 + $0x2] sm:$0x1]
        %v373 = vperm.slane %v372, 0
        %375 = vrot.lane.b32.xlu0 %v373, 64
        %v376 = vpop.permute.xlu0 %375
        %v378 = vadd.f32 %v359, %v376
        %380 = vrot.lane.b32.xlu0 %v364, 120
        %v381 = vpop.permute.xlu0 %380
        %382 = vrot.lane.b32.xlu0 %v364, 112
        %v383 = vpop.permute.xlu0 %382
        %384 = vrot.lane.b32.xlu0 %v364, 104
        %v385 = vpop.permute.xlu0 %384
        %387 = vrot.lane.b32.xlu0 %v371, 120
        %v388 = vpop.permute.xlu0 %387
        %389 = vrot.lane.b32.xlu0 %v371, 112
        %v390 = vpop.permute.xlu0 %389
        %391 = vrot.lane.b32.xlu0 %v371, 104
        %v392 = vpop.permute.xlu0 %391
        %394 = vrot.lane.b32.xlu0 %v378, 120
        %v395 = vpop.permute.xlu0 %394
        %396 = vrot.lane.b32.xlu0 %v378, 112
        %v397 = vpop.permute.xlu0 %396
        %398 = vrot.lane.b32.xlu0 %v378, 104
        %v399 = vpop.permute.xlu0 %398
        %400 = vrot.lane.b32.xlu0 %v371, 96
        %v401 = vpop.permute.xlu0 %400
        %vm402 = vcmask 64512
        %v403 = vsel %vm402, %v364, 0
        %v405 = vsel %vm402, %v401, 0
        %407 = vmatpush.xpose.msra.mxu0 0.0
        %408 = vmatpush.xpose.msra.mxu0 0.0
        %409 = vmatpush.xpose.msra.mxu0 0.0
        %410 = vmatpush.xpose.msra.mxu0 0.0
        %411 = vmatpush.xpose.msra.mxu0 0.0
        %412 = vmatpush.xpose.msra.mxu0 0.0
        %413 = vmatpush.xpose.msra.mxu0 0.0
        %414 = vmatpush.xpose.msra.mxu0 0.0
        %415 = vmatpush.xpose.msra.mxu0 0.0
        %416 = vmatpush.xpose.msra.mxu0 0.0
        %417 = vmatpush.xpose.msra.mxu0 0.0
        %418 = vmatpush.xpose.msra.mxu0 0.0
        %419 = vmatpush.xpose.msra.mxu0 0.0
        %420 = vmatpush.xpose.msra.mxu0 0.0
        %421 = vmatpush.xpose.msra.mxu0 0.0
        %422 = vmatpush.xpose.msra.mxu0 %v405
        %423 = vmatmul.f32.gmra.mxu0 %v403
        %v424 = vpop.f32.mrf.mxu0
        %v425 = vadd.f32 0.0, %v424
        %426 = vdwg.mxu0
        %427 = vrot.lane.b32.xlu0 %v388, 96
        %v428 = vpop.permute.xlu0 %427
        %v429 = vsel %vm402, %v381, 0
        %v431 = vsel %vm402, %v428, 0
        %433 = vmatpush.xpose.msra.mxu0 0.0
        %434 = vmatpush.xpose.msra.mxu0 0.0
        %435 = vmatpush.xpose.msra.mxu0 0.0
        %436 = vmatpush.xpose.msra.mxu0 0.0
        %437 = vmatpush.xpose.msra.mxu0 0.0
        %438 = vmatpush.xpose.msra.mxu0 0.0
        %439 = vmatpush.xpose.msra.mxu0 0.0
        %440 = vmatpush.xpose.msra.mxu0 0.0
        %441 = vmatpush.xpose.msra.mxu0 0.0
        %442 = vmatpush.xpose.msra.mxu0 0.0
        %443 = vmatpush.xpose.msra.mxu0 0.0
        %444 = vmatpush.xpose.msra.mxu0 0.0
        %445 = vmatpush.xpose.msra.mxu0 0.0
        %446 = vmatpush.xpose.msra.mxu0 0.0
        %447 = vmatpush.xpose.msra.mxu0 0.0
        %448 = vmatpush.xpose.msra.mxu0 %v431
        %449 = vmatmul.f32.gmra.mxu0 %v429
        %v450 = vpop.f32.mrf.mxu0
        %v451 = vadd.f32 0.0, %v450
        %452 = vdwg.mxu0
        %453 = vrot.lane.b32.xlu0 %v390, 96
        %v454 = vpop.permute.xlu0 %453
        %v455 = vsel %vm402, %v383, 0
        %v457 = vsel %vm402, %v454, 0
        %459 = vmatpush.xpose.msra.mxu0 0.0
        %460 = vmatpush.xpose.msra.mxu0 0.0
        %461 = vmatpush.xpose.msra.mxu0 0.0
        %462 = vmatpush.xpose.msra.mxu0 0.0
        %463 = vmatpush.xpose.msra.mxu0 0.0
        %464 = vmatpush.xpose.msra.mxu0 0.0
        %465 = vmatpush.xpose.msra.mxu0 0.0
        %466 = vmatpush.xpose.msra.mxu0 0.0
        %467 = vmatpush.xpose.msra.mxu0 0.0
        %468 = vmatpush.xpose.msra.mxu0 0.0
        %469 = vmatpush.xpose.msra.mxu0 0.0
        %470 = vmatpush.xpose.msra.mxu0 0.0
        %471 = vmatpush.xpose.msra.mxu0 0.0
        %472 = vmatpush.xpose.msra.mxu0 0.0
        %473 = vmatpush.xpose.msra.mxu0 0.0
        %474 = vmatpush.xpose.msra.mxu0 %v457
        %475 = vmatmul.f32.gmra.mxu0 %v455
        %v476 = vpop.f32.mrf.mxu0
        %v477 = vadd.f32 0.0, %v476
        %478 = vdwg.mxu0
        %479 = vrot.lane.b32.xlu0 %v392, 96
        %v480 = vpop.permute.xlu0 %479
        %v481 = vsel %vm402, %v385, 0
        %v483 = vsel %vm402, %v480, 0
        %485 = vmatpush.xpose.msra.mxu0 0.0
        %486 = vmatpush.xpose.msra.mxu0 0.0
        %487 = vmatpush.xpose.msra.mxu0 0.0
        %488 = vmatpush.xpose.msra.mxu0 0.0
        %489 = vmatpush.xpose.msra.mxu0 0.0
        %490 = vmatpush.xpose.msra.mxu0 0.0
        %491 = vmatpush.xpose.msra.mxu0 0.0
        %492 = vmatpush.xpose.msra.mxu0 0.0
        %493 = vmatpush.xpose.msra.mxu0 0.0
        %494 = vmatpush.xpose.msra.mxu0 0.0
        %495 = vmatpush.xpose.msra.mxu0 0.0
        %496 = vmatpush.xpose.msra.mxu0 0.0
        %497 = vmatpush.xpose.msra.mxu0 0.0
        %498 = vmatpush.xpose.msra.mxu0 0.0
        %499 = vmatpush.xpose.msra.mxu0 0.0
        %500 = vmatpush.xpose.msra.mxu0 %v483
        %501 = vmatmul.f32.gmra.mxu0 %v481
        %v502 = vpop.f32.mrf.mxu0
        %v503 = vadd.f32 0.0, %v502
        %504 = vdwg.mxu0
        %v505 = vmul.f32 %v425, 0.35355338
        %v506 = vmul.f32 %v451, 0.35355338
        %v507 = vmul.f32 %v477, 0.35355338
        %v508 = vmul.f32 %v503, 0.35355338
        %v509 = vsel %vm402, %v505, -inf
        %510 = vmax.xlane.f32.xlu0 %v509
        %v511 = vpop.xlane.xlu0 %510
        %v512 = vsel %vm402, %v506, -inf
        %513 = vmax.xlane.f32.xlu0 %v512
        %v514 = vpop.xlane.xlu0 %513
        %v515 = vsel %vm402, %v507, -inf
        %516 = vmax.xlane.f32.xlu0 %v515
        %v517 = vpop.xlane.xlu0 %516
        %v518 = vsel %vm402, %v508, -inf
        %519 = vmax.xlane.f32.xlu0 %v518
        %v520 = vpop.xlane.xlu0 %519
        %v521 = vsub.f32 %v505, %v511
        %v522 = vsub.f32 %v506, %v514
        %v523 = vsub.f32 %v507, %v517
        %v524 = vsub.f32 %v508, %v520
        %v525 = vmul.f32 %v521, 1.442695
        %v526 = vpow.pop %v525
        %v527 = vmul.f32 %v522, 1.442695
        %v528 = vpow.pop %v527
        %v529 = vmul.f32 %v523, 1.442695
        %v530 = vpow.pop %v529
        %v531 = vmul.f32 %v524, 1.442695
        %v532 = vpow.pop %v531
        %v533 = vsel %vm402, %v526, 0.0
        %534 = vadd.xlane.f32.xlu0 %v533
        %v535 = vpop.xlane.xlu0 %534
        %v536 = vsel %vm402, %v528, 0.0
        %537 = vadd.xlane.f32.xlu0 %v536
        %v538 = vpop.xlane.xlu0 %537
        %v539 = vsel %vm402, %v530, 0.0
        %540 = vadd.xlane.f32.xlu0 %v539
        %v541 = vpop.xlane.xlu0 %540
        %v542 = vsel %vm402, %v532, 0.0
        %543 = vadd.xlane.f32.xlu0 %v542
        %v544 = vpop.xlane.xlu0 %543
        %v545 = vrcp.pop %v535
        %v546 = vrcp.pop %v538
        %v547 = vrcp.pop %v541
        %v548 = vrcp.pop %v544
        %v549 = vmul.f32 %v526, %v545
        %v550 = vmul.f32 %v528, %v546
        %v551 = vmul.f32 %v530, %v547
        %v552 = vmul.f32 %v532, %v548
        %553 = vrot.lane.b32.xlu0 %v378, 64
        %v554 = vpop.permute.xlu0 %553
        %v557 = vsel %vm402, %v549, 0
        %559 = vmatpush.msra.mxu0 0.0
        %560 = vmatpush.msra.mxu0 0.0
        %561 = vmatpush.msra.mxu0 0.0
        %562 = vmatpush.msra.mxu0 0.0
        %563 = vmatpush.msra.mxu0 0.0
        %564 = vmatpush.msra.mxu0 0.0
        %565 = vmatpush.msra.mxu0 0.0
        %566 = vmatpush.msra.mxu0 0.0
        %567 = vmatpush.msra.mxu0 0.0
        %568 = vmatpush.msra.mxu0 0.0
        %569 = vmatpush.msra.mxu0 0.0
        %570 = vmatpush.msra.mxu0 0.0
        %571 = vmatpush.msra.mxu0 0.0
        %572 = vmatpush.msra.mxu0 0.0
        %573 = vmatpush.msra.mxu0 0.0
        %574 = vmatpush.msra.mxu0 %v554
        %575 = vmatmul.f32.gmra.mxu0 %v557
        %v576 = vpop.f32.mrf.mxu0
        %v577 = vadd.f32 0.0, %v576
        %578 = vdwg.mxu0
        %579 = vrot.lane.b32.xlu0 %v395, 64
        %v580 = vpop.permute.xlu0 %579
        %v583 = vsel %vm402, %v550, 0
        %585 = vmatpush.msra.mxu0 0.0
        %586 = vmatpush.msra.mxu0 0.0
        %587 = vmatpush.msra.mxu0 0.0
        %588 = vmatpush.msra.mxu0 0.0
        %589 = vmatpush.msra.mxu0 0.0
        %590 = vmatpush.msra.mxu0 0.0
        %591 = vmatpush.msra.mxu0 0.0
        %592 = vmatpush.msra.mxu0 0.0
        %593 = vmatpush.msra.mxu0 0.0
        %594 = vmatpush.msra.mxu0 0.0
        %595 = vmatpush.msra.mxu0 0.0
        %596 = vmatpush.msra.mxu0 0.0
        %597 = vmatpush.msra.mxu0 0.0
        %598 = vmatpush.msra.mxu0 0.0
        %599 = vmatpush.msra.mxu0 0.0
        %600 = vmatpush.msra.mxu0 %v580
        %601 = vmatmul.f32.gmra.mxu0 %v583
        %v602 = vpop.f32.mrf.mxu0
        %v603 = vadd.f32 0.0, %v602
        %604 = vdwg.mxu0
        %605 = vrot.lane.b32.xlu0 %v397, 64
        %v606 = vpop.permute.xlu0 %605
        %v609 = vsel %vm402, %v551, 0
        %611 = vmatpush.msra.mxu0 0.0
        %612 = vmatpush.msra.mxu0 0.0
        %613 = vmatpush.msra.mxu0 0.0
        %614 = vmatpush.msra.mxu0 0.0
        %615 = vmatpush.msra.mxu0 0.0
        %616 = vmatpush.msra.mxu0 0.0
        %617 = vmatpush.msra.mxu0 0.0
        %618 = vmatpush.msra.mxu0 0.0
        %619 = vmatpush.msra.mxu0 0.0
        %620 = vmatpush.msra.mxu0 0.0
        %621 = vmatpush.msra.mxu0 0.0
        %622 = vmatpush.msra.mxu0 0.0
        %623 = vmatpush.msra.mxu0 0.0
        %624 = vmatpush.msra.mxu0 0.0
        %625 = vmatpush.msra.mxu0 0.0
        %626 = vmatpush.msra.mxu0 %v606
        %627 = vmatmul.f32.gmra.mxu0 %v609
        %v628 = vpop.f32.mrf.mxu0
        %v629 = vadd.f32 0.0, %v628
        %630 = vdwg.mxu0
        %631 = vrot.lane.b32.xlu0 %v399, 64
        %v632 = vpop.permute.xlu0 %631
        %v635 = vsel %vm402, %v552, 0
        %637 = vmatpush.msra.mxu0 0.0
        %638 = vmatpush.msra.mxu0 0.0
        %639 = vmatpush.msra.mxu0 0.0
        %640 = vmatpush.msra.mxu0 0.0
        %641 = vmatpush.msra.mxu0 0.0
        %642 = vmatpush.msra.mxu0 0.0
        %643 = vmatpush.msra.mxu0 0.0
        %644 = vmatpush.msra.mxu0 0.0
        %645 = vmatpush.msra.mxu0 0.0
        %646 = vmatpush.msra.mxu0 0.0
        %647 = vmatpush.msra.mxu0 0.0
        %648 = vmatpush.msra.mxu0 0.0
        %649 = vmatpush.msra.mxu0 0.0
        %650 = vmatpush.msra.mxu0 0.0
        %651 = vmatpush.msra.mxu0 0.0
        %652 = vmatpush.msra.mxu0 %v632
        %653 = vmatmul.f32.gmra.mxu0 %v635
        %v654 = vpop.f32.mrf.mxu0
        %v655 = vadd.f32 0.0, %v654
        %656 = vdwg.mxu0
        %658 = vrot.lane.b32.xlu0 %v603, 8
        %v659 = vpop.permute.xlu0 %658
        %662 = vrot.lane.b32.xlu0 %v629, 16
        %v663 = vpop.permute.xlu0 %662
        %666 = vrot.lane.b32.xlu0 %v655, 24
        %v667 = vpop.permute.xlu0 %666
        %v669 = vsel %vm402, %v577, %v659
        %vm670 = vcmask 130048
        %v671 = vsel %vm670, %v669, %v663
        %vm672 = vcmask 195584
        %v673 = vsel %vm672, %v671, %v667
        %v674 = vpack.c.bf16 %v673, %v673
        %v675 = vld [vmem:[%s313 + $0x10] sm:$0xf]
        %v676 = vld [vmem:[%s313 + $0x14] sm:$0xf]
        %v677 = vld [vmem:[%s313 + $0x18] sm:$0xf]
        %v678 = vld [vmem:[%s313 + $0x1c] sm:$0xf]
        %v679 = vld [vmem:[%s318 + $0x3] sm:$0x1]
        %v680 = vperm.slane %v679, 0
        %v685 = vunpack.c.l.b16 %v675
        %v686 = vunpack.c.l.b16 %v676
        %v687 = vunpack.c.l.b16 %v677
        %v688 = vunpack.c.l.b16 %v678
        %v689 = vpack.c.b16 %v686, %v685
        %v690 = vpack.c.b16 %v688, %v687
        %v694 = vsel %vm345, %v674, 0
        %696 = vmatpush.bf16.msra.mxu0 0
        %697 = vmatpush.bf16.msra.mxu0 0
        %698 = vmatpush.bf16.msra.mxu0 0
        %699 = vmatpush.bf16.msra.mxu0 0
        %700 = vmatpush.bf16.msra.mxu0 0
        %701 = vmatpush.bf16.msra.mxu0 0
        %702 = vmatpush.bf16.msra.mxu0 %v690
        %703 = vmatpush.bf16.msra.mxu0 %v689
        %704 = vmatmul.bf16.gmra.mxu0 %v694
        %v705 = vpop.f32.mrf.mxu0
        %v706 = vadd.f32 %v680, %v705
        %v707 = vpop.f32.mrf.mxu0
        %708 = vdwg.mxu0
        %v709 = vadd.f32 %v327, %v706
        %v710 = vld [vmem:[%s318 + $0xa] sm:$0x1]
        %v711 = vld [vmem:[%s318 + $0xb] sm:$0x1]
        %v712 = vsel %vm345, %v709, 0.0
        %713 = vadd.xlane.f32.xlu0 %v712
        %v714 = vpop.xlane.xlu0 %713
        %v715 = vrcp.pop 32.0
        %v716 = vmul.f32 32.0, %v715
        %v717 = vsub.f32 1.0, %v716
        %v718 = vmul.f32 %v715, %v717
        %v719 = vadd.f32 %v715, %v718
        %vm720 = vweird.f32 %v715
        %v721 = vsel %vm720, %v715, %v719
        %v722 = vmul.f32 %v714, %v721
        %v723 = vsub.f32 %v709, %v722
        %v724 = vmul.f32 %v723, %v723
        %v725 = vsel %vm345, %v724, 0.0
        %726 = vadd.xlane.f32.xlu0 %v725
        %v727 = vpop.xlane.xlu0 %726
        %v728 = vmul.f32 %v727, %v721
        %v729 = vadd.f32 %v728, 1e-05
        %v730 = vrsqrt.pop %v729
        %v731 = vmul.f32 %v730, %v729
        %v732 = vmul.f32 %v731, %v730
        %v733 = vmul.f32 0.5, %v732
        %v734 = vsub.f32 1.5, %v733
        %v735 = vmul.f32 %v730, %v734
        %vm736 = vweird.f32 %v729
        %vm737 = vweird.f32 %v730
        %vm738 = vmor %vm736, %vm737
        %v739 = vsel %vm738, %v730, %v735
        %v740 = vmul.f32 %v723, %v739
        %v741 = vperm.slane %v710, 0
        %v742 = vmul.f32 %v740, %v741
        %v743 = vperm.slane %v711, 0
        %v744 = vadd.f32 %v742, %v743
        %v745 = vld [vmem:[%s308] sm:$0xff]
        %v746 = vld [vmem:[%s308 + $0x8] sm:$0x3]
        %v747 = vpack.c.bf16 %v744, %v744
        %v748 = vld [vmem:[%s313 + $0x20] sm:$0xf]
        %v749 = vld [vmem:[%s313 + $0x24] sm:$0xf]
        %v750 = vld [vmem:[%s313 + $0x28] sm:$0xf]
        %v751 = vld [vmem:[%s313 + $0x2c] sm:$0xf]
        %v752 = vld [vmem:[%s318 + $0x4] sm:$0x1]
        %v753 = vperm.slane %v752, 0
        %v758 = vunpack.c.l.b16 %v748
        %v759 = vunpack.c.l.b16 %v749
        %v760 = vunpack.c.l.b16 %v750
        %v761 = vunpack.c.l.b16 %v751
        %v762 = vpack.c.b16 %v759, %v758
        %v763 = vpack.c.b16 %v761, %v760
        %v767 = vsel %vm345, %v747, 0
        %769 = vmatpush.bf16.msra.mxu0 0
        %770 = vmatpush.bf16.msra.mxu0 0
        %771 = vmatpush.bf16.msra.mxu0 0
        %772 = vmatpush.bf16.msra.mxu0 0
        %773 = vmatpush.bf16.msra.mxu0 0
        %774 = vmatpush.bf16.msra.mxu0 0
        %775 = vmatpush.bf16.msra.mxu0 %v763
        %776 = vmatpush.bf16.msra.mxu0 %v762
        %777 = vmatmul.bf16.gmra.mxu0 %v767
        %v778 = vpop.f32.mrf.mxu0
        %v779 = vadd.f32 %v753, %v778
        %v780 = vpop.f32.mrf.mxu0
        %781 = vdwg.mxu0
        %v782 = vpack.c.bf16 %v746, %v745
        %v783 = vld [vmem:[%s313 + $0x30] sm:$0xf]
        %v784 = vld [vmem:[%s313 + $0x34] sm:$0xf]
        %v785 = vld [vmem:[%s313 + $0x38] sm:$0xf]
        %v786 = vld [vmem:[%s313 + $0x3c] sm:$0xf]
        %v791 = vunpack.c.l.b16 %v783
        %v792 = vunpack.c.l.b16 %v784
        %v793 = vunpack.c.l.b16 %v785
        %v794 = vunpack.c.l.b16 %v786
        %v795 = vpack.c.b16 %v792, %v791
        %v796 = vpack.c.b16 %v794, %v793
        %v800 = vsel %vm345, %v782, 0
        %802 = vmatpush.bf16.msra.mxu0 0
        %803 = vmatpush.bf16.msra.mxu0 0
        %804 = vmatpush.bf16.msra.mxu0 0
        %805 = vmatpush.bf16.msra.mxu0 0
        %806 = vmatpush.bf16.msra.mxu0 0
        %807 = vmatpush.bf16.msra.mxu0 0
        %808 = vmatpush.bf16.msra.mxu0 %v796
        %809 = vmatpush.bf16.msra.mxu0 %v795
        %810 = vmatmul.bf16.gmra.mxu0 %v800
        %v811 = vpop.f32.mrf.mxu0
        %v812 = vadd.f32 0.0, %v811
        %v813 = vpop.f32.mrf.mxu0
        %v814 = vadd.f32 0.0, %v813
        %815 = vdwg.mxu0
        %v816 = vld [vmem:[%s318 + $0x5] sm:$0x1]
        %v817 = vperm.slane %v816, 0
        %v818 = vadd.f32 %v812, %v817
        %v819 = vadd.f32 %v814, %v817
        %v820 = vld [vmem:[%s318 + $0x6] sm:$0x1]
        %v821 = vperm.slane %v820, 0
        %823 = vrot.lane.b32.xlu0 %v821, 32
        %v824 = vpop.permute.xlu0 %823
        %v826 = vadd.f32 %v812, %v824
        %v827 = vadd.f32 %v814, %v824
        %829 = vrot.lane.b32.xlu0 %v779, 120
        %v830 = vpop.permute.xlu0 %829
        %831 = vrot.lane.b32.xlu0 %v779, 112
        %v832 = vpop.permute.xlu0 %831
        %833 = vrot.lane.b32.xlu0 %v779, 104
        %v834 = vpop.permute.xlu0 %833
        %837 = vrot.lane.b32.xlu0 %v818, 120
        %v838 = vpop.permute.xlu0 %837
        %839 = vrot.lane.b32.xlu0 %v819, 120
        %v840 = vpop.permute.xlu0 %839
        %841 = vrot.lane.b32.xlu0 %v818, 112
        %v842 = vpop.permute.xlu0 %841
        %843 = vrot.lane.b32.xlu0 %v819, 112
        %v844 = vpop.permute.xlu0 %843
        %845 = vrot.lane.b32.xlu0 %v818, 104
        %v846 = vpop.permute.xlu0 %845
        %847 = vrot.lane.b32.xlu0 %v819, 104
        %v848 = vpop.permute.xlu0 %847
        %851 = vrot.lane.b32.xlu0 %v826, 120
        %v852 = vpop.permute.xlu0 %851
        %853 = vrot.lane.b32.xlu0 %v827, 120
        %v854 = vpop.permute.xlu0 %853
        %855 = vrot.lane.b32.xlu0 %v826, 112
        %v856 = vpop.permute.xlu0 %855
        %857 = vrot.lane.b32.xlu0 %v827, 112
        %v858 = vpop.permute.xlu0 %857
        %859 = vrot.lane.b32.xlu0 %v826, 104
        %v860 = vpop.permute.xlu0 %859
        %861 = vrot.lane.b32.xlu0 %v827, 104
        %v862 = vpop.permute.xlu0 %861
        %v863 = vsel %vm402, %v779, 0
        %v865 = vsel %vm402, %v818, 0
        %v867 = vsel %vm402, %v819, 0
        %869 = vmatpush.xpose.msra.mxu0 0.0
        %870 = vmatpush.xpose.msra.mxu0 0.0
        %871 = vmatpush.xpose.msra.mxu0 0.0
        %872 = vmatpush.xpose.msra.mxu0 0.0
        %873 = vmatpush.xpose.msra.mxu0 0.0
        %874 = vmatpush.xpose.msra.mxu0 0.0
        %875 = vmatpush.xpose.msra.mxu0 0.0
        %876 = vmatpush.xpose.msra.mxu0 0.0
        %877 = vmatpush.xpose.msra.mxu0 0.0
        %878 = vmatpush.xpose.msra.mxu0 0.0
        %879 = vmatpush.xpose.msra.mxu0 0.0
        %880 = vmatpush.xpose.msra.mxu0 0.0
        %881 = vmatpush.xpose.msra.mxu0 0.0
        %882 = vmatpush.xpose.msra.mxu0 0.0
        %883 = vmatpush.xpose.msra.mxu0 %v867
        %884 = vmatpush.xpose.msra.mxu0 %v865
        %885 = vmatmul.f32.gmra.mxu0 %v863
        %v886 = vpop.f32.mrf.mxu0
        %v887 = vadd.f32 0.0, %v886
        %888 = vdwg.mxu0
        %v889 = vsel %vm402, %v830, 0
        %v891 = vsel %vm402, %v838, 0
        %v893 = vsel %vm402, %v840, 0
        %895 = vmatpush.xpose.msra.mxu0 0.0
        %896 = vmatpush.xpose.msra.mxu0 0.0
        %897 = vmatpush.xpose.msra.mxu0 0.0
        %898 = vmatpush.xpose.msra.mxu0 0.0
        %899 = vmatpush.xpose.msra.mxu0 0.0
        %900 = vmatpush.xpose.msra.mxu0 0.0
        %901 = vmatpush.xpose.msra.mxu0 0.0
        %902 = vmatpush.xpose.msra.mxu0 0.0
        %903 = vmatpush.xpose.msra.mxu0 0.0
        %904 = vmatpush.xpose.msra.mxu0 0.0
        %905 = vmatpush.xpose.msra.mxu0 0.0
        %906 = vmatpush.xpose.msra.mxu0 0.0
        %907 = vmatpush.xpose.msra.mxu0 0.0
        %908 = vmatpush.xpose.msra.mxu0 0.0
        %909 = vmatpush.xpose.msra.mxu0 %v893
        %910 = vmatpush.xpose.msra.mxu0 %v891
        %911 = vmatmul.f32.gmra.mxu0 %v889
        %v912 = vpop.f32.mrf.mxu0
        %v913 = vadd.f32 0.0, %v912
        %914 = vdwg.mxu0
        %v915 = vsel %vm402, %v832, 0
        %v917 = vsel %vm402, %v842, 0
        %v919 = vsel %vm402, %v844, 0
        %921 = vmatpush.xpose.msra.mxu0 0.0
        %922 = vmatpush.xpose.msra.mxu0 0.0
        %923 = vmatpush.xpose.msra.mxu0 0.0
        %924 = vmatpush.xpose.msra.mxu0 0.0
        %925 = vmatpush.xpose.msra.mxu0 0.0
        %926 = vmatpush.xpose.msra.mxu0 0.0
        %927 = vmatpush.xpose.msra.mxu0 0.0
        %928 = vmatpush.xpose.msra.mxu0 0.0
        %929 = vmatpush.xpose.msra.mxu0 0.0
        %930 = vmatpush.xpose.msra.mxu0 0.0
        %931 = vmatpush.xpose.msra.mxu0 0.0
        %932 = vmatpush.xpose.msra.mxu0 0.0
        %933 = vmatpush.xpose.msra.mxu0 0.0
        %934 = vmatpush.xpose.msra.mxu0 0.0
        %935 = vmatpush.xpose.msra.mxu0 %v919
        %936 = vmatpush.xpose.msra.mxu0 %v917
        %937 = vmatmul.f32.gmra.mxu0 %v915
        %v938 = vpop.f32.mrf.mxu0
        %v939 = vadd.f32 0.0, %v938
        %940 = vdwg.mxu0
        %v941 = vsel %vm402, %v834, 0
        %v943 = vsel %vm402, %v846, 0
        %v945 = vsel %vm402, %v848, 0
        %947 = vmatpush.xpose.msra.mxu0 0.0
        %948 = vmatpush.xpose.msra.mxu0 0.0
        %949 = vmatpush.xpose.msra.mxu0 0.0
        %950 = vmatpush.xpose.msra.mxu0 0.0
        %951 = vmatpush.xpose.msra.mxu0 0.0
        %952 = vmatpush.xpose.msra.mxu0 0.0
        %953 = vmatpush.xpose.msra.mxu0 0.0
        %954 = vmatpush.xpose.msra.mxu0 0.0
        %955 = vmatpush.xpose.msra.mxu0 0.0
        %956 = vmatpush.xpose.msra.mxu0 0.0
        %957 = vmatpush.xpose.msra.mxu0 0.0
        %958 = vmatpush.xpose.msra.mxu0 0.0
        %959 = vmatpush.xpose.msra.mxu0 0.0
        %960 = vmatpush.xpose.msra.mxu0 0.0
        %961 = vmatpush.xpose.msra.mxu0 %v945
        %962 = vmatpush.xpose.msra.mxu0 %v943
        %963 = vmatmul.f32.gmra.mxu0 %v941
        %v964 = vpop.f32.mrf.mxu0
        %v965 = vadd.f32 0.0, %v964
        %966 = vdwg.mxu0
        %v967 = vmul.f32 %v887, 0.35355338
        %v968 = vmul.f32 %v913, 0.35355338
        %v969 = vmul.f32 %v939, 0.35355338
        %v970 = vmul.f32 %v965, 0.35355338
        %vm971 = vcmask 80896
        %v972 = vsel %vm971, %v967, -inf
        %973 = vmax.xlane.f32.xlu0 %v972
        %v974 = vpop.xlane.xlu0 %973
        %v975 = vsel %vm971, %v968, -inf
        %976 = vmax.xlane.f32.xlu0 %v975
        %v977 = vpop.xlane.xlu0 %976
        %v978 = vsel %vm971, %v969, -inf
        %979 = vmax.xlane.f32.xlu0 %v978
        %v980 = vpop.xlane.xlu0 %979
        %v981 = vsel %vm971, %v970, -inf
        %982 = vmax.xlane.f32.xlu0 %v981
        %v983 = vpop.xlane.xlu0 %982
        %v984 = vsub.f32 %v967, %v974
        %v985 = vsub.f32 %v968, %v977
        %v986 = vsub.f32 %v969, %v980
        %v987 = vsub.f32 %v970, %v983
        %v988 = vmul.f32 %v984, 1.442695
        %v989 = vpow.pop %v988
        %v990 = vmul.f32 %v985, 1.442695
        %v991 = vpow.pop %v990
        %v992 = vmul.f32 %v986, 1.442695
        %v993 = vpow.pop %v992
        %v994 = vmul.f32 %v987, 1.442695
        %v995 = vpow.pop %v994
        %v996 = vsel %vm971, %v989, 0.0
        %997 = vadd.xlane.f32.xlu0 %v996
        %v998 = vpop.xlane.xlu0 %997
        %v999 = vsel %vm971, %v991, 0.0
        %1000 = vadd.xlane.f32.xlu0 %v999
        %v1001 = vpop.xlane.xlu0 %1000
        %v1002 = vsel %vm971, %v993, 0.0
        %1003 = vadd.xlane.f32.xlu0 %v1002
        %v1004 = vpop.xlane.xlu0 %1003
        %v1005 = vsel %vm971, %v995, 0.0
        %1006 = vadd.xlane.f32.xlu0 %v1005
        %v1007 = vpop.xlane.xlu0 %1006
        %v1008 = vrcp.pop %v998
        %v1009 = vrcp.pop %v1001
        %v1010 = vrcp.pop %v1004
        %v1011 = vrcp.pop %v1007
        %v1012 = vmul.f32 %v989, %v1008
        %v1013 = vmul.f32 %v991, %v1009
        %v1014 = vmul.f32 %v993, %v1010
        %v1015 = vmul.f32 %v995, %v1011
        %1016 = vrot.lane.b32.xlu0 %v826, 96
        %v1017 = vpop.permute.xlu0 %1016
        %1018 = vrot.lane.b32.xlu0 %v827, 96
        %v1019 = vpop.permute.xlu0 %1018
        %v1022 = vsel %vm971, %v1012, 0
        %vm1024 = vcmask 1041408
        %v1025 = vsel %vm1024, %v1019, 0
        %1027 = vmatpush.msra.mxu0 0.0
        %1028 = vmatpush.msra.mxu0 0.0
        %1029 = vmatpush.msra.mxu0 0.0
        %1030 = vmatpush.msra.mxu0 0.0
        %1031 = vmatpush.msra.mxu0 0.0
        %1032 = vmatpush.msra.mxu0 0.0
        %1033 = vmatpush.msra.mxu0 0.0
        %1034 = vmatpush.msra.mxu0 0.0
        %1035 = vmatpush.msra.mxu0 0.0
        %1036 = vmatpush.msra.mxu0 0.0
        %1037 = vmatpush.msra.mxu0 0.0
        %1038 = vmatpush.msra.mxu0 0.0
        %1039 = vmatpush.msra.mxu0 0.0
        %1040 = vmatpush.msra.mxu0 0.0
        %1041 = vmatpush.msra.mxu0 %v1025
        %1042 = vmatpush.msra.mxu0 %v1017
        %1043 = vmatmul.f32.gmra.mxu0 %v1022
        %v1044 = vpop.f32.mrf.mxu0
        %v1045 = vadd.f32 0.0, %v1044
        %1046 = vdwg.mxu0
        %1047 = vrot.lane.b32.xlu0 %v852, 96
        %v1048 = vpop.permute.xlu0 %1047
        %1049 = vrot.lane.b32.xlu0 %v854, 96
        %v1050 = vpop.permute.xlu0 %1049
        %v1053 = vsel %vm971, %v1013, 0
        %v1055 = vsel %vm1024, %v1050, 0
        %1057 = vmatpush.msra.mxu0 0.0
        %1058 = vmatpush.msra.mxu0 0.0
        %1059 = vmatpush.msra.mxu0 0.0
        %1060 = vmatpush.msra.mxu0 0.0
        %1061 = vmatpush.msra.mxu0 0.0
        %1062 = vmatpush.msra.mxu0 0.0
        %1063 = vmatpush.msra.mxu0 0.0
        %1064 = vmatpush.msra.mxu0 0.0
        %1065 = vmatpush.msra.mxu0 0.0
        %1066 = vmatpush.msra.mxu0 0.0
        %1067 = vmatpush.msra.mxu0 0.0
        %1068 = vmatpush.msra.mxu0 0.0
        %1069 = vmatpush.msra.mxu0 0.0
        %1070 = vmatpush.msra.mxu0 0.0
        %1071 = vmatpush.msra.mxu0 %v1055
        %1072 = vmatpush.msra.mxu0 %v1048
        %1073 = vmatmul.f32.gmra.mxu0 %v1053
        %v1074 = vpop.f32.mrf.mxu0
        %v1075 = vadd.f32 0.0, %v1074
        %1076 = vdwg.mxu0
        %1077 = vrot.lane.b32.xlu0 %v856, 96
        %v1078 = vpop.permute.xlu0 %1077
        %1079 = vrot.lane.b32.xlu0 %v858, 96
        %v1080 = vpop.permute.xlu0 %1079
        %v1083 = vsel %vm971, %v1014, 0
        %v1085 = vsel %vm1024, %v1080, 0
        %1087 = vmatpush.msra.mxu0 0.0
        %1088 = vmatpush.msra.mxu0 0.0
        %1089 = vmatpush.msra.mxu0 0.0
        %1090 = vmatpush.msra.mxu0 0.0
        %1091 = vmatpush.msra.mxu0 0.0
        %1092 = vmatpush.msra.mxu0 0.0
        %1093 = vmatpush.msra.mxu0 0.0
        %1094 = vmatpush.msra.mxu0 0.0
        %1095 = vmatpush.msra.mxu0 0.0
        %1096 = vmatpush.msra.mxu0 0.0
        %1097 = vmatpush.msra.mxu0 0.0
        %1098 = vmatpush.msra.mxu0 0.0
        %1099 = vmatpush.msra.mxu0 0.0
        %1100 = vmatpush.msra.mxu0 0.0
        %1101 = vmatpush.msra.mxu0 %v1085
        %1102 = vmatpush.msra.mxu0 %v1078
        %1103 = vmatmul.f32.gmra.mxu0 %v1083
        %v1104 = vpop.f32.mrf.mxu0
        %v1105 = vadd.f32 0.0, %v1104
        %1106 = vdwg.mxu0
        %1107 = vrot.lane.b32.xlu0 %v860, 96
        %v1108 = vpop.permute.xlu0 %1107
        %1109 = vrot.lane.b32.xlu0 %v862, 96
        %v1110 = vpop.permute.xlu0 %1109
        %v1113 = vsel %vm971, %v1015, 0
        %v1115 = vsel %vm1024, %v1110, 0
        %1117 = vmatpush.msra.mxu0 0.0
        %1118 = vmatpush.msra.mxu0 0.0
        %1119 = vmatpush.msra.mxu0 0.0
        %1120 = vmatpush.msra.mxu0 0.0
        %1121 = vmatpush.msra.mxu0 0.0
        %1122 = vmatpush.msra.mxu0 0.0
        %1123 = vmatpush.msra.mxu0 0.0
        %1124 = vmatpush.msra.mxu0 0.0
        %1125 = vmatpush.msra.mxu0 0.0
        %1126 = vmatpush.msra.mxu0 0.0
        %1127 = vmatpush.msra.mxu0 0.0
        %1128 = vmatpush.msra.mxu0 0.0
        %1129 = vmatpush.msra.mxu0 0.0
        %1130 = vmatpush.msra.mxu0 0.0
        %1131 = vmatpush.msra.mxu0 %v1115
        %1132 = vmatpush.msra.mxu0 %v1108
        %1133 = vmatmul.f32.gmra.mxu0 %v1113
        %v1134 = vpop.f32.mrf.mxu0
        %v1135 = vadd.f32 0.0, %v1134
        %1136 = vdwg.mxu0
        %1138 = vrot.lane.b32.xlu0 %v1075, 8
        %v1139 = vpop.permute.xlu0 %1138
        %1142 = vrot.lane.b32.xlu0 %v1105, 16
        %v1143 = vpop.permute.xlu0 %1142
        %1146 = vrot.lane.b32.xlu0 %v1135, 24
        %v1147 = vpop.permute.xlu0 %1146
        %v1149 = vsel %vm402, %v1045, %v1139
        %v1150 = vsel %vm670, %v1149, %v1143
        %v1151 = vsel %vm672, %v1150, %v1147
        %v1152 = vpack.c.bf16 %v1151, %v1151
        %v1153 = vld [vmem:[%s313 + $0x40] sm:$0xf]
        %v1154 = vld [vmem:[%s313 + $0x44] sm:$0xf]
        %v1155 = vld [vmem:[%s313 + $0x48] sm:$0xf]
        %v1156 = vld [vmem:[%s313 + $0x4c] sm:$0xf]
        %v1157 = vld [vmem:[%s318 + $0x7] sm:$0x1]
        %v1158 = vperm.slane %v1157, 0
        %v1163 = vunpack.c.l.b16 %v1153
        %v1164 = vunpack.c.l.b16 %v1154
        %v1165 = vunpack.c.l.b16 %v1155
        %v1166 = vunpack.c.l.b16 %v1156
        %v1167 = vpack.c.b16 %v1164, %v1163
        %v1168 = vpack.c.b16 %v1166, %v1165
        %v1172 = vsel %vm345, %v1152, 0
        %1174 = vmatpush.bf16.msra.mxu0 0
        %1175 = vmatpush.bf16.msra.mxu0 0
        %1176 = vmatpush.bf16.msra.mxu0 0
        %1177 = vmatpush.bf16.msra.mxu0 0
        %1178 = vmatpush.bf16.msra.mxu0 0
        %1179 = vmatpush.bf16.msra.mxu0 0
        %1180 = vmatpush.bf16.msra.mxu0 %v1168
        %1181 = vmatpush.bf16.msra.mxu0 %v1167
        %1182 = vmatmul.bf16.gmra.mxu0 %v1172
        %v1183 = vpop.f32.mrf.mxu0
        %v1184 = vadd.f32 %v1158, %v1183
        %v1185 = vpop.f32.mrf.mxu0
        %1186 = vdwg.mxu0
        %v1187 = vadd.f32 %v744, %v1184
        %v1188 = vld [vmem:[%s318 + $0xc] sm:$0x1]
        %v1189 = vld [vmem:[%s318 + $0xd] sm:$0x1]
        %v1190 = vsel %vm345, %v1187, 0.0
        %1191 = vadd.xlane.f32.xlu0 %v1190
        %v1192 = vpop.xlane.xlu0 %1191
        %v1193 = vmul.f32 %v1192, %v721
        %v1194 = vsub.f32 %v1187, %v1193
        %v1195 = vmul.f32 %v1194, %v1194
        %v1196 = vsel %vm345, %v1195, 0.0
        %1197 = vadd.xlane.f32.xlu0 %v1196
        %v1198 = vpop.xlane.xlu0 %1197
        %v1199 = vmul.f32 %v1198, %v721
        %v1200 = vadd.f32 %v1199, 1e-05
        %v1201 = vrsqrt.pop %v1200
        %v1202 = vmul.f32 %v1201, %v1200
        %v1203 = vmul.f32 %v1202, %v1201
        %v1204 = vmul.f32 0.5, %v1203
        %v1205 = vsub.f32 1.5, %v1204
        %v1206 = vmul.f32 %v1201, %v1205
        %vm1207 = vweird.f32 %v1200
        %vm1208 = vweird.f32 %v1201
        %vm1209 = vmor %vm1207, %vm1208
        %v1210 = vsel %vm1209, %v1201, %v1206
        %v1211 = vmul.f32 %v1194, %v1210
        %v1212 = vperm.slane %v1188, 0
        %v1213 = vmul.f32 %v1211, %v1212
        %v1214 = vperm.slane %v1189, 0
        %v1215 = vadd.f32 %v1213, %v1214
        %v1216 = vpack.c.bf16 %v1215, %v1215
        %v1217 = vld [vmem:[%s313 + $0x50] sm:$0xf]
        %v1218 = vld [vmem:[%s313 + $0x54] sm:$0xf]
        %v1219 = vld [vmem:[%s313 + $0x58] sm:$0xf]
        %v1220 = vld [vmem:[%s313 + $0x5c] sm:$0xf]
        %v1221 = vld [vmem:[%s318 + $0x8] sm:$0x1]
        %v1222 = vperm.slane %v1221, 0
        %v1227 = vunpack.c.l.b16 %v1217
        %v1228 = vunpack.c.l.b16 %v1218
        %v1229 = vunpack.c.l.b16 %v1219
        %v1230 = vunpack.c.l.b16 %v1220
        %v1231 = vpack.c.b16 %v1228, %v1227
        %v1232 = vpack.c.b16 %v1230, %v1229
        %v1236 = vsel %vm345, %v1216, 0
        %1238 = vmatpush.bf16.msra.mxu0 0
        %1239 = vmatpush.bf16.msra.mxu0 0
        %1240 = vmatpush.bf16.msra.mxu0 0
        %1241 = vmatpush.bf16.msra.mxu0 0
        %1242 = vmatpush.bf16.msra.mxu0 0
        %1243 = vmatpush.bf16.msra.mxu0 0
        %1244 = vmatpush.bf16.msra.mxu0 %v1232
        %1245 = vmatpush.bf16.msra.mxu0 %v1231
        %1246 = vmatmul.bf16.gmra.mxu0 %v1236
        %v1247 = vpop.f32.mrf.mxu0
        %v1248 = vadd.f32 %v1222, %v1247
        %v1249 = vpop.f32.mrf.mxu0
        %1250 = vdwg.mxu0
        %v1251 = vmax.f32 %v1248, 0.0
        %v1252 = vpack.c.bf16 %v1251, %v1251
        %v1253 = vld [vmem:[%s313 + $0x60] sm:$0xf]
        %v1254 = vld [vmem:[%s313 + $0x64] sm:$0xf]
        %v1255 = vld [vmem:[%s313 + $0x68] sm:$0xf]
        %v1256 = vld [vmem:[%s313 + $0x6c] sm:$0xf]
        %v1257 = vld [vmem:[%s313 + $0x70] sm:$0xf]
        %v1258 = vld [vmem:[%s313 + $0x74] sm:$0xf]
        %v1259 = vld [vmem:[%s313 + $0x78] sm:$0xf]
        %v1260 = vld [vmem:[%s313 + $0x7c] sm:$0xf]
        %v1261 = vld [vmem:[%s318 + $0x9] sm:$0x1]
        %v1262 = vperm.slane %v1261, 0
        %v1271 = vunpack.c.l.b16 %v1253
        %v1272 = vunpack.c.l.b16 %v1254
        %v1273 = vunpack.c.l.b16 %v1255
        %v1274 = vunpack.c.l.b16 %v1256
        %v1275 = vunpack.c.l.b16 %v1257
        %v1276 = vunpack.c.l.b16 %v1258
        %v1277 = vunpack.c.l.b16 %v1259
        %v1278 = vunpack.c.l.b16 %v1260
        %v1279 = vpack.c.b16 %v1272, %v1271
        %v1280 = vpack.c.b16 %v1274, %v1273
        %v1281 = vpack.c.b16 %v1276, %v1275
        %v1282 = vpack.c.b16 %v1278, %v1277
        %vm1287 = vcmask 523264
        %v1289 = vsel %vm1287, %v1252, 0
        %1291 = vmatpush.bf16.msra.mxu0 0
        %1292 = vmatpush.bf16.msra.mxu0 0
        %1293 = vmatpush.bf16.msra.mxu0 0
        %1294 = vmatpush.bf16.msra.mxu0 0
        %1295 = vmatpush.bf16.msra.mxu0 %v1282
        %1296 = vmatpush.bf16.msra.mxu0 %v1281
        %1297 = vmatpush.bf16.msra.mxu0 %v1280
        %1298 = vmatpush.bf16.msra.mxu0 %v1279
        %1299 = vmatmul.bf16.gmra.mxu0 %v1289
        %v1300 = vpop.f32.mrf.mxu0
        %v1301 = vadd.f32 %v1262, %v1300
        %v1302 = vpop.f32.mrf.mxu0
        %1303 = vdwg.mxu0
        %v1304 = vadd.f32 %v1215, %v1301
        %v1305 = vld [vmem:[%s318 + $0xe] sm:$0x1]
        %v1306 = vld [vmem:[%s318 + $0xf] sm:$0x1]
        %v1307 = vsel %vm345, %v1304, 0.0
        %1308 = vadd.xlane.f32.xlu0 %v1307
        %v1309 = vpop.xlane.xlu0 %1308
        %v1310 = vmul.f32 %v1309, %v721
        %v1311 = vsub.f32 %v1304, %v1310
        %v1312 = vmul.f32 %v1311, %v1311
        %v1313 = vsel %vm345, %v1312, 0.0
        %1314 = vadd.xlane.f32.xlu0 %v1313
        %v1315 = vpop.xlane.xlu0 %1314
        %v1316 = vmul.f32 %v1315, %v721
        %v1317 = vadd.f32 %v1316, 1e-05
        %v1318 = vrsqrt.pop %v1317
        %v1319 = vmul.f32 %v1318, %v1317
        %v1320 = vmul.f32 %v1319, %v1318
        %v1321 = vmul.f32 0.5, %v1320
        %v1322 = vsub.f32 1.5, %v1321
        %v1323 = vmul.f32 %v1318, %v1322
        %vm1324 = vweird.f32 %v1317
        %vm1325 = vweird.f32 %v1318
        %vm1326 = vmor %vm1324, %vm1325
        %v1327 = vsel %vm1326, %v1318, %v1323
        %v1328 = vmul.f32 %v1311, %v1327
        %v1329 = vperm.slane %v1305, 0
        %v1330 = vmul.f32 %v1328, %v1329
        %v1331 = vperm.slane %v1306, 0
        %v1332 = vadd.f32 %v1330, %v1331
        %1333 = vst.msk [vmem:[#allocation2] sm:$0xff] %vm345, %v1332
        %p1334 = scmp.eq.s32.totalorder %s25, 1
        // Predicated region
        $region49: #{decoder_forward.1} parent=43 // pred_check
          %p1335 = pneg %p1334
        $region50: #{decoder_forward.1} parent=43 // pred_check_branch
          %1337 = sbr.rel (%p1335) target = $region52
        $region51: #{decoder_forward.1} parent=43 // pred_region
          %v1338 = vpack.c.bf16 %v1332, %v1332
          %v1339 = vld [vmem:[%s4] sm:$0xf]
          %v1340 = vld [vmem:[%s4 + $0x4] sm:$0xf]
          %v1341 = vld [vmem:[%s4 + $0x8] sm:$0xf]
          %v1342 = vld [vmem:[%s4 + $0xc] sm:$0xf]
          %v1343 = vld [vmem:[%s5] sm:$0x1]
          %v1345 = vperm.slane %v1343, 0
          %v1351 = vunpack.c.l.b16 %v1339
          %v1352 = vunpack.c.l.b16 %v1340
          %v1353 = vunpack.c.l.b16 %v1341
          %v1354 = vunpack.c.l.b16 %v1342
          %v1355 = vpack.c.b16 %v1352, %v1351
          %v1356 = vpack.c.b16 %v1354, %v1353
          %v1360 = vsel %vm345, %v1338, 0
          %1362 = vmatpush.bf16.msra.mxu0 0
          %1363 = vmatpush.bf16.msra.mxu0 0
          %1364 = vmatpush.bf16.msra.mxu0 0
          %1365 = vmatpush.bf16.msra.mxu0 0
          %1366 = vmatpush.bf16.msra.mxu0 0
          %1367 = vmatpush.bf16.msra.mxu0 0
          %1368 = vmatpush.bf16.msra.mxu0 %v1356
          %1369 = vmatpush.bf16.msra.mxu0 %v1355
          %1370 = vmatmul.bf16.gmra.mxu0 %v1360
          %v1371 = vpop.f32.mrf.mxu0
          %v1372 = vadd.f32 %v1345, %v1371
          %v1373 = vpop.f32.mrf.mxu0
          %1374 = vdwg.mxu0
          %1375 = vst [vmem:[%s299] sm:$0xff] %v1372
        $region52: #{decoder_forward.1} parent=43 // pred_fallthru
          _
        %s1376 = sand.u32 %s186, 1
        %s1377 = scalar_lea.sflag [#allocation4], %s1376
        %s1378 = sand.u32 %s186, 1
        %s1379 = smul.addr %s1378, 8
        %s1380 = scalar_lea.vmem [#allocation3], %s1379
        // Predicated region
        $region53: #{decoder_forward.1} parent=43 // pred_check
          %p1381 = pneg %p196
        $region54: #{decoder_forward.1} parent=43 // pred_check_branch
          %1383 = sbr.rel (%p1381) target = $region56
        $region55: #{decoder_forward.1} parent=43 // pred_region
          %1385 = vsyncadd %s1377, 0
          %s1386 = smul.addr %s24, 8
          %s1387 = scalar_lea.hbm %s6, %s1386
          %s1389 = sshll.u32 %s1380, 4
          %s1390 = int_to_ptr.vmem [resolvable:$true] %s1389
          %s1391 = sshll.u32 %s1387, 4
          %s1392 = int_to_ptr.hbm [resolvable:$true] %s1391
          %1394 = dma.vmem_to_hbm [thread:$0]  %s1390, 128, %s1392, %s1377
        $region56: #{decoder_forward.1} parent=43 // pred_fallthru
          _
      $region44: #{decoder_forward.1} parent=5 // pred_fallthru
        _
      %p1395 = scmp.le.s32.totalorder 2, %s15
      // Predicated region
      $region57: #{decoder_forward.1} parent=5 // pred_check
        %p1396 = pneg %p1395
      $region58: #{decoder_forward.1} parent=5 // pred_check_branch
        %1398 = sbr.rel (%p1396) target = $region60
      $region59: #{decoder_forward.1} parent=5 // pred_region
        %s1399 = ssub.s32 %s15, 2
        // Predicated region
        $region61: #{decoder_forward.1} parent=59 // pred_check
          %p1400 = pneg %p202
        $region62: #{decoder_forward.1} parent=59 // pred_check_branch
          %1402 = sbr.rel (%p1400) target = $region64
        $region63: #{decoder_forward.1} parent=59 // pred_region
          %s1403 = sand.u32 %s187, 1
          %s1404 = scalar_lea.sflag [#allocation4], %s1403
          %s1405 = sand.u32 %s187, 1
          %s1406 = smul.addr %s1405, 8
          %s1407 = scalar_lea.vmem [#allocation3], %s1406
          %1409 = dma.done %s1404, 128
        $region64: #{decoder_forward.1} parent=59 // pred_fallthru
          _
      $region60: #{decoder_forward.1} parent=5 // pred_fallthru
        _
    $region6: #{decoder_forward.1} parent=1 // loop_footer
      %s19 = sadd.s32 1, %s15
    $region7: #{decoder_forward.1} parent=1 // loop_footer_branch
      %14 = sbr.rel target = $region3
    $region8: #{decoder_forward.1} parent=1 // loop_exit
      _
    %1410 = vsyncpa [#allocation4], 1
    %s1411 = scalar_lea.sflag [#allocation4], 1
    %1412 = vsyncpa %s1411, 1

</llo_original>
